<compile_context>
chip_gen: v6e
topology: v6e:2x2x1
jax: 0.10.0
libtpu: 0.0.40
codegen_flags: <defaults>
</compile_context>

<pallas_src>
import functools
import math

import jax
import jax.numpy as jnp
from jax.experimental import pallas as pl
from jax.experimental.pallas import tpu as pltpu

T_ITERS = 5
EPS = 1e-5


# ----------------------------------------------------------------------------- kernel

def _oni_kernel(z_ref, w_ref, *, group_rows, t_iters, use_bf16):
    """One grid step: gb groups packed as a (P, d) slab, P = gb * group_rows.

    All gb groups are processed with single dense matmuls on a block-diagonal S / B
    (cross-group n x n blocks are zeroed once after the Gram).  Block-diagonal structure
    is closed under matmul, so the Newton chain and the final B @ Zc stay exact while
    using the full MXU width instead of gb tiny batched matmuls.
    """
    n = group_rows
    z = z_ref[...].astype(jnp.float32)                     # (P, d), unpadded d
    p, d = z.shape

    # Per-row mean over the true d columns, then center.
    mean = jnp.sum(z, axis=-1, keepdims=True) * (1.0 / d)
    zc = z - mean                                          # (P, d) f32

    # Cast the matmul operand immediately: the f32 slab's live range ends here, so only
    # the (half-size) bf16 copy stays live across the Newton chain when use_bf16.
    zc_mm = zc.astype(jnp.bfloat16) if use_bf16 else zc

    # Packed Gram: one dense (P, P) matmul (A @ A^T form; contracts d on both operands).
    s = jax.lax.dot_general(zc_mm, zc_mm, (((1,), (1,)), ((), ())),
                            preferred_element_type=jnp.float32)          # (P, P)

    # Identity / block-diagonal masks via >= 2-D iota (TPU requirement).
    rows = jax.lax.broadcasted_iota(jnp.int32, (p, p), 0)
    cols = jax.lax.broadcasted_iota(jnp.int32, (p, p), 1)
    eye = (rows == cols).astype(jnp.float32)

    if p != n:
        # Group id = index // n, computed with an exact f32 multiply+floor trick
        # (avoids vector integer division, which is not reliably supported by Mosaic).
        # (i + 0.5)/n is never an integer and the rounding error is << 0.5/n for the
        # P <= MXU-width blocks produced by the picker, so floor() is exact.
        inv_n = 1.0 / n
        rg = jnp.floor((rows.astype(jnp.float32) + 0.5) * inv_n)
        cg = jnp.floor((cols.astype(jnp.float32) + 0.5) * inv_n)
        block_mask = (rg == cg).astype(jnp.float32)
        s = s * block_mask                                  # zero cross-group blocks once
    s = s + EPS * eye

    # Per-group Frobenius norm, broadcast to every row of its group.  Rows of group g
    # hold only block-g entries after the mask, so one tiny (P, P) @ (P, 1) mask-matmul
    # gives each row its group's ||S_g||_F^2.
    sq_row = jnp.sum(s * s, axis=-1, keepdims=True)         # (P, 1)
    if p == n:                                              # single group in this block
        group_norm_sq = jnp.sum(sq_row, axis=0, keepdims=True)          # (1, 1)
    else:
        group_norm_sq = jnp.dot(block_mask, sq_row,
                                preferred_element_type=jnp.float32)      # (P, 1)
    inv_norm = jax.lax.rsqrt(group_norm_sq)                 # 1 / ||S_g||_F      (EUP)
    rsqrt_norm = jnp.sqrt(inv_norm)                         # 1 / sqrt(||S_g||_F)
    s = s * inv_norm                                        # row scale; block-diag kept

    def mm(a, b):
        return jnp.dot(a, b, preferred_element_type=jnp.float32)

    # Newton-Schulz: B_{t+1} = 1.5*B_t - 0.5*(B_t^3 @ S), B_0 = I.
    # First iteration peeled: B_1 = 1.5*I - 0.5*S (no matmuls).
    if t_iters == 0:
        b = eye
    else:
        b = 1.5 * eye - 0.5 * s
        for _ in range(t_iters - 1):
            b3 = mm(mm(b, b), b)
            b = 1.5 * b - 0.5 * mm(b3, s)

    # Fold the final 1/sqrt(||S_g||_F) into the small (P, P) matrix, not the (P, d) result.
    b = b * rsqrt_norm
    b_mm = b.astype(jnp.bfloat16) if use_bf16 else b

    w = mm(b_mm, zc_mm)                                     # (P, d) f32
    w_ref[...] = w.astype(w_ref.dtype)


# ----------------------------------------------------------------------------- sizing

def _tpu_params():
    """(mxu_width, vmem_capacity_bytes, num_tensorcores) with conservative fallbacks."""
    kind = ""
    try:
        kind = jax.devices()[0].device_kind.lower()
    except Exception:
        pass
    is_v7 = ("v7" in kind) or ("tpu7" in kind) or ("7x" in kind)
    is_v6 = "v6" in kind
    mxu_width = 256 if (is_v7 or is_v6) else 128
    num_tc = 2 if is_v7 else 1
    vmem_cap = None
    try:
        vmem_cap = int(pltpu.get_tpu_info().vmem_capacity_bytes)
    except Exception:
        vmem_cap = None
    if not vmem_cap:
        vmem_cap = (64 << 20) if is_v7 else (128 << 20)
    return mxu_width, vmem_cap, num_tc


def _block_footprint_bytes(gb, n, d, itemsize, use_bf16):
    """Per-grid-step VMEM estimate: double-buffered in/out blocks + in-kernel temporaries."""
    p = gb * n
    slab = p * d
    return (4 * slab * itemsize                      # in + out blocks, double-buffered
            + 2 * slab * 4                           # f32 z/zc and f32 result
            + slab * (2 if use_bf16 else 4)          # matmul operand live across Newton chain
            + 12 * p * p * 4)                        # eye/mask/S/B/B^2/B^3 temporaries


def _pick_group_batch(num_groups, n, d, itemsize, use_bf16, mxu_width, vmem_budget, num_tc):
    """Largest divisor gb of num_groups such that the packed width gb*n stays within the
    MXU width, the sublane dim is legal (gb*n % 8 == 0, or the block is the full array),
    the generation-aware VMEM budget is respected, and — on multi-TC chips — the grid keeps
    at least num_tc steps so the 'parallel' axis can shard across cores."""
    divisors = [g for g in range(num_groups, 0, -1) if num_groups % g == 0]

    def sublane_ok(gb):
        return ((gb * n) % 8 == 0) or (gb == num_groups)

    def ok(gb, need_mxu_cap, need_multi_step):
        if not sublane_ok(gb):
            return False
        if _block_footprint_bytes(gb, n, d, itemsize, use_bf16) > vmem_budget:
            return False
        if need_mxu_cap and gb > 1 and gb * n > mxu_width:
            return False
        if need_multi_step and (num_groups // gb) < num_tc:
            return False
        return True

    prefs = []
    if num_tc > 1 and num_groups >= num_tc:
        prefs.append((True, True))                  # v7x: keep >= 2 grid steps
    prefs += [(True, False), (False, False)]
    for need_mxu_cap, need_multi_step in prefs:
        for gb in divisors:
            if ok(gb, need_mxu_cap, need_multi_step):
                return gb

    # Nothing fit the budget: smallest sublane-legal divisor; rely on the raised vmem limit.
    # TODO(synk): d-tiled variant (accumulate S over d-chunks with pl.when init, then stream
    # W = B @ Zc chunk-by-chunk) for groups whose (n, d) slab alone overflows v7x's 64 MiB.
    for gb in reversed(divisors):
        if sublane_ok(gb):
            return gb
    return num_groups


# ----------------------------------------------------------------------------- wrapper

def oni_norm(weight: jax.Array, norm_groups: int = 1, T: int = T_ITERS,
             allow_bf16_matmul: bool = False) -> jax.Array:
    """ONINorm forward. `weight` is a conv-style weight [O, I, KH, KW] (any rank >= 2)."""
    out_ch = weight.shape[0]
    assert out_ch % norm_groups == 0
    n = out_ch // norm_groups
    d = math.prod(weight.shape[1:])

    # Flatten to (out_ch, d) — a pure reshape of a contiguous array, so no extra HBM pass
    # (no pad before the kernel, no slice after it).
    z = weight.reshape(out_ch, d)

    dtype = jnp.dtype(weight.dtype)
    itemsize = dtype.itemsize
    use_bf16 = (dtype == jnp.bfloat16) or allow_bf16_matmul

    mxu_width, vmem_cap, num_tc = _tpu_params()
    vmem_budget = int(vmem_cap * 0.70)               # ~90 MiB v5e/v6e, ~45 MiB v7x
    gb = _pick_group_batch(norm_groups, n, d, itemsize, use_bf16,
                           mxu_width, vmem_budget, num_tc)
    p = gb * n
    grid = (norm_groups // gb,)

    vmem_est = _block_footprint_bytes(gb, n, d, itemsize, use_bf16)
    vmem_limit = int(min(max(32 << 20, int(1.3 * vmem_est)), vmem_cap - (8 << 20)))

    # Advisory cost hint for XLA's scheduler around the custom call.
    flops = (norm_groups // gb) * (4 * p * p * d + 6 * max(T - 1, 0) * p ** 3 + 2 * p * p)
    cost = pl.CostEstimate(flops=int(flops),
                           transcendentals=int(2 * out_ch),
                           bytes_accessed=int(2 * out_ch * d * itemsize))

    kernel = functools.partial(_oni_kernel, group_rows=n, t_iters=T, use_bf16=use_bf16)

    w = pl.pallas_call(
        kernel,
        out_shape=jax.ShapeDtypeStruct((out_ch, d), weight.dtype),
        grid_spec=pltpu.PrefetchScalarGridSpec(
            num_scalar_prefetch=0,
            grid=grid,
            # Block (p, d): last dim equals the full array dim (exempt from the 128 rule);
            # sublane dim p is kept a multiple of 8 (or the full dim) by the picker.
            in_specs=[pl.BlockSpec((p, d), lambda g: (g, 0))],
            out_specs=pl.BlockSpec((p, d), lambda g: (g, 0)),
        ),
        compiler_params=pltpu.CompilerParams(
            dimension_semantics=("parallel",),
            vmem_limit_bytes=vmem_limit),
        cost_estimate=cost,
    )(z)

    return w.reshape(weight.shape)


# ----------------------------------------------------------------------------- reference

def _oni_norm_ref(weight: jax.Array, norm_groups: int = 1, T: int = T_ITERS) -> jax.Array:
    """Pure-JAX reference mirroring the PyTorch module, for correctness checking."""
    out_ch = weight.shape[0]
    n = out_ch // norm_groups
    z = weight.reshape(norm_groups, n, -1).astype(jnp.float32)
    zc = z - jnp.mean(z, axis=-1, keepdims=True)
    s = jnp.einsum("gnd,gmd->gnm", zc, zc)
    eye = jnp.eye(n, dtype=jnp.float32)[None]
    s = s + EPS * eye
    norm_s = jnp.sqrt(jnp.sum(s * s, axis=(1, 2), keepdims=True))
    s = s / norm_s
    b = jnp.broadcast_to(eye, s.shape)
    for _ in range(T):
        b3 = jnp.einsum("gij,gjk,gkl->gil", b, b, b)
        b = 1.5 * b - 0.5 * jnp.einsum("gij,gjk->gik", b3, s)
    w = jnp.einsum("gij,gjd->gid", b, zc) / jnp.sqrt(norm_s)
    return w.reshape(weight.shape).astype(weight.dtype)


if __name__ == "__main__":
    key = jax.random.PRNGKey(0)
    k1, k2 = jax.random.split(key)

    # Conv2d-style weight [O, I, KH, KW]: O=16, I=4, 4x4 kernel, 2 norm groups
    # -> per group n = 8 rows, d = 64 columns (unpadded; block last dim = full array dim).
    w1 = jax.random.normal(k1, (16, 4, 4, 4), dtype=jnp.float32)
    o1 = jax.block_until_ready(oni_norm(w1, norm_groups=2))
    r1 = _oni_norm_ref(w1, norm_groups=2)
    assert o1.shape == w1.shape
    assert jnp.allclose(o1, r1, atol=1e-3, rtol=1e-3), "mismatch vs JAX reference (case 1)"

    # Second shape exercising group packing with an odd d: O=32, I=3, 3x3 kernel, 4 groups
    # -> n = 8, d = 27; groups packed into one block-diagonal (P, P) Newton chain.
    w2 = jax.random.normal(k2, (32, 3, 3, 3), dtype=jnp.float32)
    o2 = jax.block_until_ready(oni_norm(w2, norm_groups=4))
    r2 = _oni_norm_ref(w2, norm_groups=4)
    assert o2.shape == w2.shape
    assert jnp.allclose(o2, r2, atol=1e-3, rtol=1e-3), "mismatch vs JAX reference (case 2)"

    print("KERNEL_OK")
</pallas_src>

<mosaic_0001>
module attributes {stable_mosaic.version = 11 : i64} {
  func.func @_oni_kernel(%arg0: i32, %arg1: memref<16x64xf32, #tpu.memory_space<vmem>>, %arg2: memref<16x64xf32, #tpu.memory_space<vmem>>) attributes {dimension_semantics = [#tpu.dimension_semantics<parallel>], iteration_bounds = array<i64: 1>, scalar_prefetch = 0 : i64, scratch_operands = 0 : i64, tpu.core_type = #tpu.core_type<tc>, window_params = [{transform_indices = @transform_0, window_bounds = array<i64: 16, 64>}, {transform_indices = @transform_1, window_bounds = array<i64: 16, 64>}]} {
    %c0 = arith.constant 0 : index
    %c0_0 = arith.constant 0 : index
    %0 = vector.load %arg1[%c0, %c0_0] : memref<16x64xf32, #tpu.memory_space<vmem>>, vector<16x64xf32>
    %cst = arith.constant dense<0.000000e+00> : vector<16xf32>
    %1 = vector.multi_reduction <add>, %0, %cst [1] : vector<16x64xf32> to vector<16xf32>
    %2 = vector.shape_cast %1 : vector<16xf32> to vector<16x1xf32>
    %cst_1 = arith.constant 1.562500e-02 : f32
    %3 = vector.broadcast %cst_1 : f32 to vector<16x1xf32>
    %4 = arith.mulf %2, %3 : vector<16x1xf32>
    %5 = vector.broadcast %4 : vector<16x1xf32> to vector<16x64xf32>
    %6 = arith.subf %0, %5 : vector<16x64xf32>
    %cst_2 = arith.constant dense<0.000000e+00> : vector<16x16xf32>
    %7 = tpu.matmul %6, %6, %cst_2 {dimension_numbers = #tpu.dot_dimension_numbers<[1], [1], [0], [0], [0, 0, 1, 0], [], []>} : vector<16x64xf32>, vector<16x64xf32>, vector<16x16xf32> -> vector<16x16xf32>
    %8 = tpu.iota {dimensions = array<i32: 0>} : vector<16x16xi32>
    %9 = tpu.iota {dimensions = array<i32: 1>} : vector<16x16xi32>
    %10 = arith.cmpi eq, %8, %9 : vector<16x16xi32>
    %11 = arith.extui %10 : vector<16x16xi1> to vector<16x16xi32>
    %12 = arith.sitofp %11 : vector<16x16xi32> to vector<16x16xf32>
    %13 = arith.sitofp %8 : vector<16x16xi32> to vector<16x16xf32>
    %cst_3 = arith.constant 5.000000e-01 : f32
    %14 = vector.broadcast %cst_3 : f32 to vector<16x16xf32>
    %15 = arith.addf %13, %14 : vector<16x16xf32>
    %cst_4 = arith.constant 1.250000e-01 : f32
    %16 = vector.broadcast %cst_4 : f32 to vector<16x16xf32>
    %17 = arith.mulf %15, %16 : vector<16x16xf32>
    %18 = math.floor %17 : vector<16x16xf32>
    %19 = arith.sitofp %9 : vector<16x16xi32> to vector<16x16xf32>
    %cst_5 = arith.constant 5.000000e-01 : f32
    %20 = vector.broadcast %cst_5 : f32 to vector<16x16xf32>
    %21 = arith.addf %19, %20 : vector<16x16xf32>
    %cst_6 = arith.constant 1.250000e-01 : f32
    %22 = vector.broadcast %cst_6 : f32 to vector<16x16xf32>
    %23 = arith.mulf %21, %22 : vector<16x16xf32>
    %24 = math.floor %23 : vector<16x16xf32>
    %25 = arith.cmpf oeq, %18, %24 : vector<16x16xf32>
    %26 = arith.extui %25 : vector<16x16xi1> to vector<16x16xi32>
    %27 = arith.sitofp %26 : vector<16x16xi32> to vector<16x16xf32>
    %28 = arith.mulf %7, %27 : vector<16x16xf32>
    %cst_7 = arith.constant 9.99999974E-6 : f32
    %29 = vector.broadcast %cst_7 : f32 to vector<16x16xf32>
    %30 = arith.mulf %29, %12 : vector<16x16xf32>
    %31 = arith.addf %28, %30 : vector<16x16xf32>
    %32 = arith.mulf %31, %31 : vector<16x16xf32>
    %cst_8 = arith.constant dense<0.000000e+00> : vector<16xf32>
    %33 = vector.multi_reduction <add>, %32, %cst_8 [1] : vector<16x16xf32> to vector<16xf32>
    %34 = vector.shape_cast %33 : vector<16xf32> to vector<16x1xf32>
    %cst_9 = arith.constant dense<0.000000e+00> : vector<16x1xf32>
    %35 = tpu.matmul %27, %34, %cst_9 {dimension_numbers = #tpu.dot_dimension_numbers<[1], [0], [0], [1], [0, 0, 1, 1], [], []>} : vector<16x16xf32>, vector<16x1xf32>, vector<16x1xf32> -> vector<16x1xf32>
    %36 = math.rsqrt %35 : vector<16x1xf32>
    %37 = math.sqrt %36 : vector<16x1xf32>
    %38 = vector.broadcast %36 : vector<16x1xf32> to vector<16x16xf32>
    %39 = arith.mulf %31, %38 : vector<16x16xf32>
    %cst_10 = arith.constant 1.500000e+00 : f32
    %40 = vector.broadcast %cst_10 : f32 to vector<16x16xf32>
    %41 = arith.mulf %40, %12 : vector<16x16xf32>
    %cst_11 = arith.constant 5.000000e-01 : f32
    %42 = vector.broadcast %cst_11 : f32 to vector<16x16xf32>
    %43 = arith.mulf %42, %39 : vector<16x16xf32>
    %44 = arith.subf %41, %43 : vector<16x16xf32>
    %cst_12 = arith.constant dense<0.000000e+00> : vector<16x16xf32>
    %45 = tpu.matmul %44, %44, %cst_12 {dimension_numbers = #tpu.dot_dimension_numbers<[1], [0], [0], [1], [0, 0, 1, 1], [], []>} : vector<16x16xf32>, vector<16x16xf32>, vector<16x16xf32> -> vector<16x16xf32>
    %cst_13 = arith.constant dense<0.000000e+00> : vector<16x16xf32>
    %46 = tpu.matmul %45, %44, %cst_13 {dimension_numbers = #tpu.dot_dimension_numbers<[1], [0], [0], [1], [0, 0, 1, 1], [], []>} : vector<16x16xf32>, vector<16x16xf32>, vector<16x16xf32> -> vector<16x16xf32>
    %cst_14 = arith.constant 1.500000e+00 : f32
    %47 = vector.broadcast %cst_14 : f32 to vector<16x16xf32>
    %48 = arith.mulf %47, %44 : vector<16x16xf32>
    %cst_15 = arith.constant dense<0.000000e+00> : vector<16x16xf32>
    %49 = tpu.matmul %46, %39, %cst_15 {dimension_numbers = #tpu.dot_dimension_numbers<[1], [0], [0], [1], [0, 0, 1, 1], [], []>} : vector<16x16xf32>, vector<16x16xf32>, vector<16x16xf32> -> vector<16x16xf32>
    %cst_16 = arith.constant 5.000000e-01 : f32
    %50 = vector.broadcast %cst_16 : f32 to vector<16x16xf32>
    %51 = arith.mulf %50, %49 : vector<16x16xf32>
    %52 = arith.subf %48, %51 : vector<16x16xf32>
    %cst_17 = arith.constant dense<0.000000e+00> : vector<16x16xf32>
    %53 = tpu.matmul %52, %52, %cst_17 {dimension_numbers = #tpu.dot_dimension_numbers<[1], [0], [0], [1], [0, 0, 1, 1], [], []>} : vector<16x16xf32>, vector<16x16xf32>, vector<16x16xf32> -> vector<16x16xf32>
    %cst_18 = arith.constant dense<0.000000e+00> : vector<16x16xf32>
    %54 = tpu.matmul %53, %52, %cst_18 {dimension_numbers = #tpu.dot_dimension_numbers<[1], [0], [0], [1], [0, 0, 1, 1], [], []>} : vector<16x16xf32>, vector<16x16xf32>, vector<16x16xf32> -> vector<16x16xf32>
    %cst_19 = arith.constant 1.500000e+00 : f32
    %55 = vector.broadcast %cst_19 : f32 to vector<16x16xf32>
    %56 = arith.mulf %55, %52 : vector<16x16xf32>
    %cst_20 = arith.constant dense<0.000000e+00> : vector<16x16xf32>
    %57 = tpu.matmul %54, %39, %cst_20 {dimension_numbers = #tpu.dot_dimension_numbers<[1], [0], [0], [1], [0, 0, 1, 1], [], []>} : vector<16x16xf32>, vector<16x16xf32>, vector<16x16xf32> -> vector<16x16xf32>
    %cst_21 = arith.constant 5.000000e-01 : f32
    %58 = vector.broadcast %cst_21 : f32 to vector<16x16xf32>
    %59 = arith.mulf %58, %57 : vector<16x16xf32>
    %60 = arith.subf %56, %59 : vector<16x16xf32>
    %cst_22 = arith.constant dense<0.000000e+00> : vector<16x16xf32>
    %61 = tpu.matmul %60, %60, %cst_22 {dimension_numbers = #tpu.dot_dimension_numbers<[1], [0], [0], [1], [0, 0, 1, 1], [], []>} : vector<16x16xf32>, vector<16x16xf32>, vector<16x16xf32> -> vector<16x16xf32>
    %cst_23 = arith.constant dense<0.000000e+00> : vector<16x16xf32>
    %62 = tpu.matmul %61, %60, %cst_23 {dimension_numbers = #tpu.dot_dimension_numbers<[1], [0], [0], [1], [0, 0, 1, 1], [], []>} : vector<16x16xf32>, vector<16x16xf32>, vector<16x16xf32> -> vector<16x16xf32>
    %cst_24 = arith.constant 1.500000e+00 : f32
    %63 = vector.broadcast %cst_24 : f32 to vector<16x16xf32>
    %64 = arith.mulf %63, %60 : vector<16x16xf32>
    %cst_25 = arith.constant dense<0.000000e+00> : vector<16x16xf32>
    %65 = tpu.matmul %62, %39, %cst_25 {dimension_numbers = #tpu.dot_dimension_numbers<[1], [0], [0], [1], [0, 0, 1, 1], [], []>} : vector<16x16xf32>, vector<16x16xf32>, vector<16x16xf32> -> vector<16x16xf32>
    %cst_26 = arith.constant 5.000000e-01 : f32
    %66 = vector.broadcast %cst_26 : f32 to vector<16x16xf32>
    %67 = arith.mulf %66, %65 : vector<16x16xf32>
    %68 = arith.subf %64, %67 : vector<16x16xf32>
    %cst_27 = arith.constant dense<0.000000e+00> : vector<16x16xf32>
    %69 = tpu.matmul %68, %68, %cst_27 {dimension_numbers = #tpu.dot_dimension_numbers<[1], [0], [0], [1], [0, 0, 1, 1], [], []>} : vector<16x16xf32>, vector<16x16xf32>, vector<16x16xf32> -> vector<16x16xf32>
    %cst_28 = arith.constant dense<0.000000e+00> : vector<16x16xf32>
    %70 = tpu.matmul %69, %68, %cst_28 {dimension_numbers = #tpu.dot_dimension_numbers<[1], [0], [0], [1], [0, 0, 1, 1], [], []>} : vector<16x16xf32>, vector<16x16xf32>, vector<16x16xf32> -> vector<16x16xf32>
    %cst_29 = arith.constant 1.500000e+00 : f32
    %71 = vector.broadcast %cst_29 : f32 to vector<16x16xf32>
    %72 = arith.mulf %71, %68 : vector<16x16xf32>
    %cst_30 = arith.constant dense<0.000000e+00> : vector<16x16xf32>
    %73 = tpu.matmul %70, %39, %cst_30 {dimension_numbers = #tpu.dot_dimension_numbers<[1], [0], [0], [1], [0, 0, 1, 1], [], []>} : vector<16x16xf32>, vector<16x16xf32>, vector<16x16xf32> -> vector<16x16xf32>
    %cst_31 = arith.constant 5.000000e-01 : f32
    %74 = vector.broadcast %cst_31 : f32 to vector<16x16xf32>
    %75 = arith.mulf %74, %73 : vector<16x16xf32>
    %76 = arith.subf %72, %75 : vector<16x16xf32>
    %77 = vector.broadcast %37 : vector<16x1xf32> to vector<16x16xf32>
    %78 = arith.mulf %76, %77 : vector<16x16xf32>
    %cst_32 = arith.constant dense<0.000000e+00> : vector<16x64xf32>
    %79 = tpu.matmul %78, %6, %cst_32 {dimension_numbers = #tpu.dot_dimension_numbers<[1], [0], [0], [1], [0, 0, 1, 1], [], []>} : vector<16x16xf32>, vector<16x64xf32>, vector<16x64xf32> -> vector<16x64xf32>
    %c0_33 = arith.constant 0 : index
    %c0_34 = arith.constant 0 : index
    %80 = vector.load %arg2[%c0_33, %c0_34] : memref<16x64xf32, #tpu.memory_space<vmem>>, vector<16x64xf32>
    tpu.vector_store %arg2[%c0_33, %c0_34], %79 {strides = array<i32>} : memref<16x64xf32, #tpu.memory_space<vmem>>, vector<16x64xf32>,
    return
  }
  func.func @transform_0(%arg0: i32) -> (i32, i32) {
    %c0_i32 = arith.constant 0 : i32
    %c0_i32_0 = arith.constant 0 : i32
    return %arg0, %c0_i32 : i32, i32
  }
  func.func @transform_1(%arg0: i32) -> (i32, i32) {
    %c0_i32 = arith.constant 0 : i32
    %c0_i32_0 = arith.constant 0 : i32
    return %arg0, %c0_i32 : i32, i32
  }
}

</mosaic_0001>

<llo_original>
// kernel: tpu_custom_call.1
$region0: #{tpu_custom_call.1}
  #allocation0 [shape = 'u32[]', space=smem, size = 0x4, offset = 0x4, fixed_abs, tag = 'smem constant byte address 0x4 - core index']
  #allocation1 [shape = 'u32[144,128]{1,0:T(1,128)}', space=vmem, size = 0x12000, scoped, tag = 'internal scratch']
  %s0 = inlined_call_operand.hbm [shape: f32[16,64], index: 0, kind: input, shape index: {}]
  %s1 = inlined_call_operand.hbm [shape: f32[16,64], index: 1, kind: output, shape index: {}]
  %s2 = sld [smem:[#allocation0]]
  $region18: #{tpu_custom_call.1} parent=0
    _
  %s4 = ssub.s32 1, %s2
  %s5 = scalar_select 0, %s4, %s2
  $region1: #{tpu_custom_call.1} parent=0
    #allocation2 [shape = 'u8[8192]{0}', space=vmem, size = 0x2000, scoped, tag = 'input window, operand 0, single buffered']
    #allocation3 [shape = 's32[1]{0}', space=sflag, size = 0x4, scoped, tag = 'scoped memory for tpu_custom_call.1']
    #allocation4 [shape = 's32[1]{0}', space=sflag, size = 0x4, scoped, tag = 'scoped memory for tpu_custom_call.1']
    #allocation5 [shape = 'u8[8192]{0}', space=vmem, size = 0x2000, scoped, tag = 'output window, operand 0, single buffered']
    %6 = vsyncpa [#allocation3], 0
    %7 = vsyncpa [#allocation4], 0
    // Predicated region
    $region2: #{tpu_custom_call.1} parent=1 // pred_check
      _
    $region3: #{tpu_custom_call.1} parent=1 // pred_check_branch
      %9 = sbr.rel (0) target = $region5
    $region4: #{tpu_custom_call.1} parent=1 // pred_region
      %s11 = ssub.s32 256, 256
      %12 = vsyncadd [#allocation3], %s11
      %s13 = sshll.u32 [#allocation2], 4
      %s14 = int_to_ptr.vmem [resolvable:$true] %s13
      %19 = dma.hbm_to_vmem [thread:$0]  %s0, 256, %s14, [#allocation3], 128, 128, 8
    $region5: #{tpu_custom_call.1} parent=1 // pred_fallthru
      _
    // Predicated region
    $region6: #{tpu_custom_call.1} parent=1 // pred_check
      _
    $region7: #{tpu_custom_call.1} parent=1 // pred_check_branch
      %21 = sbr.rel (0) target = $region9
    $region8: #{tpu_custom_call.1} parent=1 // pred_region
      %22 = dma.done [#allocation3], 256
    $region9: #{tpu_custom_call.1} parent=1 // pred_fallthru
      _
    %v23 = vld [vmem:[#allocation2] sm:$0xff]
    %v24 = vld [vmem:[#allocation2 + $0x8] sm:$0xff]
    %vm25 = vcmask 523264
    %v26 = vsel %vm25, %v23, 0.0
    %27 = vadd.xlane.f32.xlu0 %v26
    %v28 = vpop.xlane.xlu0 %27
    %v29 = vsel %vm25, %v24, 0.0
    %30 = vadd.xlane.f32.xlu0 %v29
    %v31 = vpop.xlane.xlu0 %30
    %v32 = vmul.f32 %v28, 0.015625
    %v33 = vmul.f32 %v31, 0.015625
    %v34 = vsub.f32 %v23, %v32
    %v35 = vsub.f32 %v24, %v33
    %v37 = vsel %vm25, %v34, 0
    %v40 = vsel %vm25, %v35, 0
    %42 = vmatprep.subr.mxu0 0.0
    %43 = vmatpush1.xpose.msra.mxu0 0.0
    %44 = vmatprep.subr.mxu0 0.0
    %45 = vmatpush1.xpose.msra.mxu0 0.0
    %46 = vmatprep.subr.mxu0 0.0
    %47 = vmatpush1.xpose.msra.mxu0 0.0
    %48 = vmatprep.subr.mxu0 0.0
    %49 = vmatpush1.xpose.msra.mxu0 0.0
    %50 = vmatprep.subr.mxu0 0.0
    %51 = vmatpush1.xpose.msra.mxu0 0.0
    %52 = vmatprep.subr.mxu0 0.0
    %53 = vmatpush1.xpose.msra.mxu0 0.0
    %54 = vmatprep.subr.mxu0 0.0
    %55 = vmatpush1.xpose.msra.mxu0 0.0
    %56 = vmatprep.subr.mxu0 0.0
    %57 = vmatpush1.xpose.msra.mxu0 0.0
    %58 = vmatprep.subr.mxu0 0.0
    %59 = vmatpush1.xpose.msra.mxu0 0.0
    %60 = vmatprep.subr.mxu0 0.0
    %61 = vmatpush1.xpose.msra.mxu0 0.0
    %62 = vmatprep.subr.mxu0 0.0
    %63 = vmatpush1.xpose.msra.mxu0 0.0
    %64 = vmatprep.subr.mxu0 0.0
    %65 = vmatpush1.xpose.msra.mxu0 0.0
    %66 = vmatprep.subr.mxu0 0.0
    %67 = vmatpush1.xpose.msra.mxu0 0.0
    %68 = vmatprep.subr.mxu0 0.0
    %69 = vmatpush1.xpose.msra.mxu0 0.0
    %70 = vmatprep.subr.mxu0 0.0
    %71 = vmatpush1.xpose.msra.mxu0 %v40
    %72 = vmatprep.subr.mxu0 0.0
    %73 = vmatpush1.xpose.msra.mxu0 %v37
    %74 = vmatprep.subr.mxu0 0.0
    %75 = vmatpush2.xpose.msra.mxu0 0.0
    %76 = vmatprep.subr.mxu0 0.0
    %77 = vmatpush2.xpose.msra.mxu0 0.0
    %78 = vmatprep.subr.mxu0 0.0
    %79 = vmatpush2.xpose.msra.mxu0 0.0
    %80 = vmatprep.subr.mxu0 0.0
    %81 = vmatpush2.xpose.msra.mxu0 0.0
    %82 = vmatprep.subr.mxu0 0.0
    %83 = vmatpush2.xpose.msra.mxu0 0.0
    %84 = vmatprep.subr.mxu0 0.0
    %85 = vmatpush2.xpose.msra.mxu0 0.0
    %86 = vmatprep.subr.mxu0 0.0
    %87 = vmatpush2.xpose.msra.mxu0 0.0
    %88 = vmatprep.subr.mxu0 0.0
    %89 = vmatpush2.xpose.msra.mxu0 0.0
    %90 = vmatprep.subr.mxu0 0.0
    %91 = vmatpush2.xpose.msra.mxu0 0.0
    %92 = vmatprep.subr.mxu0 0.0
    %93 = vmatpush2.xpose.msra.mxu0 0.0
    %94 = vmatprep.subr.mxu0 0.0
    %95 = vmatpush2.xpose.msra.mxu0 0.0
    %96 = vmatprep.subr.mxu0 0.0
    %97 = vmatpush2.xpose.msra.mxu0 0.0
    %98 = vmatprep.subr.mxu0 0.0
    %99 = vmatpush2.xpose.msra.mxu0 0.0
    %100 = vmatprep.subr.mxu0 0.0
    %101 = vmatpush2.xpose.msra.mxu0 0.0
    %102 = vmatprep.subr.mxu0 0.0
    %103 = vmatpush2.xpose.msra.mxu0 0.0
    %104 = vmatprep.subr.mxu0 0.0
    %105 = vmatpush2.xpose.msra.mxu0 0.0
    %106 = vmatprep.mubr.f32.mxu0 0.0
    %107 = vmatmul.mubr.f32.gmra.mxu0 %v37
    %v108 = vpop.f32.mrf.mxu0
    %v109 = vadd.f32 0.0, %v108
    %v110 = vpop.f32.mrf.mxu0
    %111 = vmatprep.mubr.f32.mxu0 0.0
    %112 = vmatmul.mubr.f32.gmra.mxu0 %v40
    %v113 = vpop.f32.mrf.mxu0
    %v114 = vadd.f32 0.0, %v113
    %v115 = vpop.f32.mrf.mxu0
    %116 = vdwg.mxu0
    %v117 = vlaneseq
    %v118 = vshrl.u32 %v117, 7
    %v119 = vadd.s32 %v118, 8
    %v120 = vlaneseq
    %v121 = vand.u32 %v120, 127
    %vm122 = vcmp.eq.s32.totalorder %v118, %v121
    %vm123 = vcmp.eq.s32.totalorder %v119, %v121
    %v124 = vsel %vm122, 1, 0
    %v125 = vsel %vm123, 1, 0
    %v126 = vcvt.s32.f32 %v124
    %v127 = vcvt.s32.f32 %v125
    %v128 = vcvt.s32.f32 %v118
    %v129 = vcvt.s32.f32 %v119
    %v130 = vadd.f32 %v128, 0.5
    %v131 = vadd.f32 %v129, 0.5
    %v132 = vmul.f32 %v130, 0.125
    %v133 = vmul.f32 %v131, 0.125
    %v134 = vfloor.f32 %v132
    %v135 = vfloor.f32 %v133
    %v136 = vcvt.s32.f32 %v121
    %v137 = vadd.f32 %v136, 0.5
    %v138 = vmul.f32 %v137, 0.125
    %v139 = vfloor.f32 %v138
    %vm140 = vcmp.eq.f32.partialorder %v134, %v139
    %vm141 = vcmp.eq.f32.partialorder %v135, %v139
    %v142 = vsel %vm140, 1, 0
    %v143 = vsel %vm141, 1, 0
    %v144 = vcvt.s32.f32 %v142
    %v145 = vcvt.s32.f32 %v143
    %v146 = vmul.f32 %v109, %v144
    %v147 = vmul.f32 %v114, %v145
    %v148 = vmul.f32 %v126, 1e-05
    %v149 = vmul.f32 %v127, 1e-05
    %v150 = vadd.f32 %v146, %v148
    %v151 = vadd.f32 %v147, %v149
    %v152 = vmul.f32 %v150, %v150
    %v153 = vmul.f32 %v151, %v151
    %vm154 = vcmask 130048
    %v155 = vsel %vm154, %v152, 0.0
    %156 = vadd.xlane.f32.xlu0 %v155
    %v157 = vpop.xlane.xlu0 %156
    %v158 = vsel %vm154, %v153, 0.0
    %159 = vadd.xlane.f32.xlu0 %v158
    %v160 = vpop.xlane.xlu0 %159
    %v162 = vsel %vm154, %v144, 0
    %v165 = vsel %vm154, %v145, 0
    %167 = vmatprep.subr.mxu0 0.0
    %168 = vmatpush1.msra.mxu0 0.0
    %169 = vmatprep.subr.mxu0 0.0
    %170 = vmatpush1.msra.mxu0 0.0
    %171 = vmatprep.subr.mxu0 0.0
    %172 = vmatpush1.msra.mxu0 0.0
    %173 = vmatprep.subr.mxu0 0.0
    %174 = vmatpush1.msra.mxu0 0.0
    %175 = vmatprep.subr.mxu0 0.0
    %176 = vmatpush1.msra.mxu0 0.0
    %177 = vmatprep.subr.mxu0 0.0
    %178 = vmatpush1.msra.mxu0 0.0
    %179 = vmatprep.subr.mxu0 0.0
    %180 = vmatpush1.msra.mxu0 0.0
    %181 = vmatprep.subr.mxu0 0.0
    %182 = vmatpush1.msra.mxu0 0.0
    %183 = vmatprep.subr.mxu0 0.0
    %184 = vmatpush1.msra.mxu0 0.0
    %185 = vmatprep.subr.mxu0 0.0
    %186 = vmatpush1.msra.mxu0 0.0
    %187 = vmatprep.subr.mxu0 0.0
    %188 = vmatpush1.msra.mxu0 0.0
    %189 = vmatprep.subr.mxu0 0.0
    %190 = vmatpush1.msra.mxu0 0.0
    %191 = vmatprep.subr.mxu0 0.0
    %192 = vmatpush1.msra.mxu0 0.0
    %193 = vmatprep.subr.mxu0 0.0
    %194 = vmatpush1.msra.mxu0 0.0
    %195 = vmatprep.subr.mxu0 0.0
    %196 = vmatpush1.msra.mxu0 %v160
    %197 = vmatprep.subr.mxu0 0.0
    %198 = vmatpush1.msra.mxu0 %v157
    %199 = vmatprep.subr.mxu0 0.0
    %200 = vmatpush2.msra.mxu0 0.0
    %201 = vmatprep.subr.mxu0 0.0
    %202 = vmatpush2.msra.mxu0 0.0
    %203 = vmatprep.subr.mxu0 0.0
    %204 = vmatpush2.msra.mxu0 0.0
    %205 = vmatprep.subr.mxu0 0.0
    %206 = vmatpush2.msra.mxu0 0.0
    %207 = vmatprep.subr.mxu0 0.0
    %208 = vmatpush2.msra.mxu0 0.0
    %209 = vmatprep.subr.mxu0 0.0
    %210 = vmatpush2.msra.mxu0 0.0
    %211 = vmatprep.subr.mxu0 0.0
    %212 = vmatpush2.msra.mxu0 0.0
    %213 = vmatprep.subr.mxu0 0.0
    %214 = vmatpush2.msra.mxu0 0.0
    %215 = vmatprep.subr.mxu0 0.0
    %216 = vmatpush2.msra.mxu0 0.0
    %217 = vmatprep.subr.mxu0 0.0
    %218 = vmatpush2.msra.mxu0 0.0
    %219 = vmatprep.subr.mxu0 0.0
    %220 = vmatpush2.msra.mxu0 0.0
    %221 = vmatprep.subr.mxu0 0.0
    %222 = vmatpush2.msra.mxu0 0.0
    %223 = vmatprep.subr.mxu0 0.0
    %224 = vmatpush2.msra.mxu0 0.0
    %225 = vmatprep.subr.mxu0 0.0
    %226 = vmatpush2.msra.mxu0 0.0
    %227 = vmatprep.subr.mxu0 0.0
    %228 = vmatpush2.msra.mxu0 0.0
    %229 = vmatprep.subr.mxu0 0.0
    %230 = vmatpush2.msra.mxu0 0.0
    %231 = vmatprep.mubr.f32.mxu0 0.0
    %232 = vmatmul.mubr.f32.gmra.mxu0 %v162
    %v233 = vpop.f32.mrf.mxu0
    %v234 = vadd.f32 0.0, %v233
    %v235 = vpop.f32.mrf.mxu0
    %236 = vmatprep.mubr.f32.mxu0 0.0
    %237 = vmatmul.mubr.f32.gmra.mxu0 %v165
    %v238 = vpop.f32.mrf.mxu0
    %v239 = vadd.f32 0.0, %v238
    %v240 = vpop.f32.mrf.mxu0
    %241 = vdwg.mxu0
    %v242 = vrsqrt.pop %v234
    %v243 = vrsqrt.pop %v239
    %v244 = vrsqrt.pop %v242
    %v245 = vmul.f32 %v242, %v244
    %vm246 = vcmp.eq.f32.partialorder %v242, inf
    %v247 = vsel %vm246, %v242, %v245
    %vm248 = vcmp.eq.f32.partialorder %v242, 0.0
    %v249 = vand.u32 %v242, 2147483648
    %v250 = vsel %vm248, %v249, %v247
    %v251 = vrsqrt.pop %v243
    %v252 = vmul.f32 %v243, %v251
    %vm253 = vcmp.eq.f32.partialorder %v243, inf
    %v254 = vsel %vm253, %v243, %v252
    %vm255 = vcmp.eq.f32.partialorder %v243, 0.0
    %v256 = vand.u32 %v243, 2147483648
    %v257 = vsel %vm255, %v256, %v254
    %259 = vset.pattern.permute.xlu0 0
    %260 = vperm.xlu0 %259, %v242
    %v261 = vpop.permute.xlu0 %260
    %264 = vset.pattern.permute.xlu0 0
    %265 = vperm.xlu0 %264, %v243
    %v266 = vpop.permute.xlu0 %265
    %v268 = vmul.f32 %v150, %v261
    %v269 = vmul.f32 %v151, %v266
    %v270 = vmul.f32 %v126, 1.5
    %v271 = vmul.f32 %v127, 1.5
    %v272 = vmul.f32 %v268, 0.5
    %v273 = vmul.f32 %v269, 0.5
    %v274 = vsub.f32 %v270, %v272
    %v275 = vsub.f32 %v271, %v273
    %v277 = vsel %vm154, %v274, 0
    %v280 = vsel %vm154, %v275, 0
    %282 = vmatprep.subr.mxu0 0.0
    %283 = vmatpush1.msra.mxu0 0.0
    %284 = vmatprep.subr.mxu0 0.0
    %285 = vmatpush1.msra.mxu0 0.0
    %286 = vmatprep.subr.mxu0 0.0
    %287 = vmatpush1.msra.mxu0 0.0
    %288 = vmatprep.subr.mxu0 0.0
    %289 = vmatpush1.msra.mxu0 0.0
    %290 = vmatprep.subr.mxu0 0.0
    %291 = vmatpush1.msra.mxu0 0.0
    %292 = vmatprep.subr.mxu0 0.0
    %293 = vmatpush1.msra.mxu0 0.0
    %294 = vmatprep.subr.mxu0 0.0
    %295 = vmatpush1.msra.mxu0 0.0
    %296 = vmatprep.subr.mxu0 0.0
    %297 = vmatpush1.msra.mxu0 0.0
    %298 = vmatprep.subr.mxu0 0.0
    %299 = vmatpush1.msra.mxu0 0.0
    %300 = vmatprep.subr.mxu0 0.0
    %301 = vmatpush1.msra.mxu0 0.0
    %302 = vmatprep.subr.mxu0 0.0
    %303 = vmatpush1.msra.mxu0 0.0
    %304 = vmatprep.subr.mxu0 0.0
    %305 = vmatpush1.msra.mxu0 0.0
    %306 = vmatprep.subr.mxu0 0.0
    %307 = vmatpush1.msra.mxu0 0.0
    %308 = vmatprep.subr.mxu0 0.0
    %309 = vmatpush1.msra.mxu0 0.0
    %310 = vmatprep.subr.mxu0 0.0
    %311 = vmatpush1.msra.mxu0 %v275
    %312 = vmatprep.subr.mxu0 0.0
    %313 = vmatpush1.msra.mxu0 %v274
    %314 = vmatprep.subr.mxu0 0.0
    %315 = vmatpush2.msra.mxu0 0.0
    %316 = vmatprep.subr.mxu0 0.0
    %317 = vmatpush2.msra.mxu0 0.0
    %318 = vmatprep.subr.mxu0 0.0
    %319 = vmatpush2.msra.mxu0 0.0
    %320 = vmatprep.subr.mxu0 0.0
    %321 = vmatpush2.msra.mxu0 0.0
    %322 = vmatprep.subr.mxu0 0.0
    %323 = vmatpush2.msra.mxu0 0.0
    %324 = vmatprep.subr.mxu0 0.0
    %325 = vmatpush2.msra.mxu0 0.0
    %326 = vmatprep.subr.mxu0 0.0
    %327 = vmatpush2.msra.mxu0 0.0
    %328 = vmatprep.subr.mxu0 0.0
    %329 = vmatpush2.msra.mxu0 0.0
    %330 = vmatprep.subr.mxu0 0.0
    %331 = vmatpush2.msra.mxu0 0.0
    %332 = vmatprep.subr.mxu0 0.0
    %333 = vmatpush2.msra.mxu0 0.0
    %334 = vmatprep.subr.mxu0 0.0
    %335 = vmatpush2.msra.mxu0 0.0
    %336 = vmatprep.subr.mxu0 0.0
    %337 = vmatpush2.msra.mxu0 0.0
    %338 = vmatprep.subr.mxu0 0.0
    %339 = vmatpush2.msra.mxu0 0.0
    %340 = vmatprep.subr.mxu0 0.0
    %341 = vmatpush2.msra.mxu0 0.0
    %342 = vmatprep.subr.mxu0 0.0
    %343 = vmatpush2.msra.mxu0 0.0
    %344 = vmatprep.subr.mxu0 0.0
    %345 = vmatpush2.msra.mxu0 0.0
    %346 = vmatprep.mubr.f32.mxu0 0.0
    %347 = vmatmul.mubr.f32.gmra.mxu0 %v277
    %v348 = vpop.f32.mrf.mxu0
    %v349 = vadd.f32 0.0, %v348
    %v350 = vpop.f32.mrf.mxu0
    %351 = vmatprep.mubr.f32.mxu0 0.0
    %352 = vmatmul.mubr.f32.gmra.mxu0 %v280
    %v353 = vpop.f32.mrf.mxu0
    %v354 = vadd.f32 0.0, %v353
    %v355 = vpop.f32.mrf.mxu0
    %356 = vdwg.mxu0
    %v358 = vsel %vm154, %v349, 0
    %v361 = vsel %vm154, %v354, 0
    %363 = vmatprep.subr.mxu0 0.0
    %364 = vmatpush1.msra.mxu0 0.0
    %365 = vmatprep.subr.mxu0 0.0
    %366 = vmatpush1.msra.mxu0 0.0
    %367 = vmatprep.subr.mxu0 0.0
    %368 = vmatpush1.msra.mxu0 0.0
    %369 = vmatprep.subr.mxu0 0.0
    %370 = vmatpush1.msra.mxu0 0.0
    %371 = vmatprep.subr.mxu0 0.0
    %372 = vmatpush1.msra.mxu0 0.0
    %373 = vmatprep.subr.mxu0 0.0
    %374 = vmatpush1.msra.mxu0 0.0
    %375 = vmatprep.subr.mxu0 0.0
    %376 = vmatpush1.msra.mxu0 0.0
    %377 = vmatprep.subr.mxu0 0.0
    %378 = vmatpush1.msra.mxu0 0.0
    %379 = vmatprep.subr.mxu0 0.0
    %380 = vmatpush1.msra.mxu0 0.0
    %381 = vmatprep.subr.mxu0 0.0
    %382 = vmatpush1.msra.mxu0 0.0
    %383 = vmatprep.subr.mxu0 0.0
    %384 = vmatpush1.msra.mxu0 0.0
    %385 = vmatprep.subr.mxu0 0.0
    %386 = vmatpush1.msra.mxu0 0.0
    %387 = vmatprep.subr.mxu0 0.0
    %388 = vmatpush1.msra.mxu0 0.0
    %389 = vmatprep.subr.mxu0 0.0
    %390 = vmatpush1.msra.mxu0 0.0
    %391 = vmatprep.subr.mxu0 0.0
    %392 = vmatpush1.msra.mxu0 %v275
    %393 = vmatprep.subr.mxu0 0.0
    %394 = vmatpush1.msra.mxu0 %v274
    %395 = vmatprep.subr.mxu0 0.0
    %396 = vmatpush2.msra.mxu0 0.0
    %397 = vmatprep.subr.mxu0 0.0
    %398 = vmatpush2.msra.mxu0 0.0
    %399 = vmatprep.subr.mxu0 0.0
    %400 = vmatpush2.msra.mxu0 0.0
    %401 = vmatprep.subr.mxu0 0.0
    %402 = vmatpush2.msra.mxu0 0.0
    %403 = vmatprep.subr.mxu0 0.0
    %404 = vmatpush2.msra.mxu0 0.0
    %405 = vmatprep.subr.mxu0 0.0
    %406 = vmatpush2.msra.mxu0 0.0
    %407 = vmatprep.subr.mxu0 0.0
    %408 = vmatpush2.msra.mxu0 0.0
    %409 = vmatprep.subr.mxu0 0.0
    %410 = vmatpush2.msra.mxu0 0.0
    %411 = vmatprep.subr.mxu0 0.0
    %412 = vmatpush2.msra.mxu0 0.0
    %413 = vmatprep.subr.mxu0 0.0
    %414 = vmatpush2.msra.mxu0 0.0
    %415 = vmatprep.subr.mxu0 0.0
    %416 = vmatpush2.msra.mxu0 0.0
    %417 = vmatprep.subr.mxu0 0.0
    %418 = vmatpush2.msra.mxu0 0.0
    %419 = vmatprep.subr.mxu0 0.0
    %420 = vmatpush2.msra.mxu0 0.0
    %421 = vmatprep.subr.mxu0 0.0
    %422 = vmatpush2.msra.mxu0 0.0
    %423 = vmatprep.subr.mxu0 0.0
    %424 = vmatpush2.msra.mxu0 0.0
    %425 = vmatprep.subr.mxu0 0.0
    %426 = vmatpush2.msra.mxu0 0.0
    %427 = vmatprep.mubr.f32.mxu0 0.0
    %428 = vmatmul.mubr.f32.gmra.mxu0 %v358
    %v429 = vpop.f32.mrf.mxu0
    %v430 = vadd.f32 0.0, %v429
    %v431 = vpop.f32.mrf.mxu0
    %432 = vmatprep.mubr.f32.mxu0 0.0
    %433 = vmatmul.mubr.f32.gmra.mxu0 %v361
    %v434 = vpop.f32.mrf.mxu0
    %v435 = vadd.f32 0.0, %v434
    %v436 = vpop.f32.mrf.mxu0
    %437 = vdwg.mxu0
    %v438 = vmul.f32 %v274, 1.5
    %v439 = vmul.f32 %v275, 1.5
    %v441 = vsel %vm154, %v430, 0
    %v444 = vsel %vm154, %v435, 0
    %446 = vmatprep.subr.mxu0 0.0
    %447 = vmatpush1.msra.mxu0 0.0
    %448 = vmatprep.subr.mxu0 0.0
    %449 = vmatpush1.msra.mxu0 0.0
    %450 = vmatprep.subr.mxu0 0.0
    %451 = vmatpush1.msra.mxu0 0.0
    %452 = vmatprep.subr.mxu0 0.0
    %453 = vmatpush1.msra.mxu0 0.0
    %454 = vmatprep.subr.mxu0 0.0
    %455 = vmatpush1.msra.mxu0 0.0
    %456 = vmatprep.subr.mxu0 0.0
    %457 = vmatpush1.msra.mxu0 0.0
    %458 = vmatprep.subr.mxu0 0.0
    %459 = vmatpush1.msra.mxu0 0.0
    %460 = vmatprep.subr.mxu0 0.0
    %461 = vmatpush1.msra.mxu0 0.0
    %462 = vmatprep.subr.mxu0 0.0
    %463 = vmatpush1.msra.mxu0 0.0
    %464 = vmatprep.subr.mxu0 0.0
    %465 = vmatpush1.msra.mxu0 0.0
    %466 = vmatprep.subr.mxu0 0.0
    %467 = vmatpush1.msra.mxu0 0.0
    %468 = vmatprep.subr.mxu0 0.0
    %469 = vmatpush1.msra.mxu0 0.0
    %470 = vmatprep.subr.mxu0 0.0
    %471 = vmatpush1.msra.mxu0 0.0
    %472 = vmatprep.subr.mxu0 0.0
    %473 = vmatpush1.msra.mxu0 0.0
    %474 = vmatprep.subr.mxu0 0.0
    %475 = vmatpush1.msra.mxu0 %v269
    %476 = vmatprep.subr.mxu0 0.0
    %477 = vmatpush1.msra.mxu0 %v268
    %478 = vmatprep.subr.mxu0 0.0
    %479 = vmatpush2.msra.mxu0 0.0
    %480 = vmatprep.subr.mxu0 0.0
    %481 = vmatpush2.msra.mxu0 0.0
    %482 = vmatprep.subr.mxu0 0.0
    %483 = vmatpush2.msra.mxu0 0.0
    %484 = vmatprep.subr.mxu0 0.0
    %485 = vmatpush2.msra.mxu0 0.0
    %486 = vmatprep.subr.mxu0 0.0
    %487 = vmatpush2.msra.mxu0 0.0
    %488 = vmatprep.subr.mxu0 0.0
    %489 = vmatpush2.msra.mxu0 0.0
    %490 = vmatprep.subr.mxu0 0.0
    %491 = vmatpush2.msra.mxu0 0.0
    %492 = vmatprep.subr.mxu0 0.0
    %493 = vmatpush2.msra.mxu0 0.0
    %494 = vmatprep.subr.mxu0 0.0
    %495 = vmatpush2.msra.mxu0 0.0
    %496 = vmatprep.subr.mxu0 0.0
    %497 = vmatpush2.msra.mxu0 0.0
    %498 = vmatprep.subr.mxu0 0.0
    %499 = vmatpush2.msra.mxu0 0.0
    %500 = vmatprep.subr.mxu0 0.0
    %501 = vmatpush2.msra.mxu0 0.0
    %502 = vmatprep.subr.mxu0 0.0
    %503 = vmatpush2.msra.mxu0 0.0
    %504 = vmatprep.subr.mxu0 0.0
    %505 = vmatpush2.msra.mxu0 0.0
    %506 = vmatprep.subr.mxu0 0.0
    %507 = vmatpush2.msra.mxu0 0.0
    %508 = vmatprep.subr.mxu0 0.0
    %509 = vmatpush2.msra.mxu0 0.0
    %510 = vmatprep.mubr.f32.mxu0 0.0
    %511 = vmatmul.mubr.f32.gmra.mxu0 %v441
    %v512 = vpop.f32.mrf.mxu0
    %v513 = vadd.f32 0.0, %v512
    %v514 = vpop.f32.mrf.mxu0
    %515 = vmatprep.mubr.f32.mxu0 0.0
    %516 = vmatmul.mubr.f32.gmra.mxu0 %v444
    %v517 = vpop.f32.mrf.mxu0
    %v518 = vadd.f32 0.0, %v517
    %v519 = vpop.f32.mrf.mxu0
    %520 = vdwg.mxu0
    %v521 = vmul.f32 %v513, 0.5
    %v522 = vmul.f32 %v518, 0.5
    %v523 = vsub.f32 %v438, %v521
    %v524 = vsub.f32 %v439, %v522
    %v526 = vsel %vm154, %v523, 0
    %v529 = vsel %vm154, %v524, 0
    %531 = vmatprep.subr.mxu0 0.0
    %532 = vmatpush1.msra.mxu0 0.0
    %533 = vmatprep.subr.mxu0 0.0
    %534 = vmatpush1.msra.mxu0 0.0
    %535 = vmatprep.subr.mxu0 0.0
    %536 = vmatpush1.msra.mxu0 0.0
    %537 = vmatprep.subr.mxu0 0.0
    %538 = vmatpush1.msra.mxu0 0.0
    %539 = vmatprep.subr.mxu0 0.0
    %540 = vmatpush1.msra.mxu0 0.0
    %541 = vmatprep.subr.mxu0 0.0
    %542 = vmatpush1.msra.mxu0 0.0
    %543 = vmatprep.subr.mxu0 0.0
    %544 = vmatpush1.msra.mxu0 0.0
    %545 = vmatprep.subr.mxu0 0.0
    %546 = vmatpush1.msra.mxu0 0.0
    %547 = vmatprep.subr.mxu0 0.0
    %548 = vmatpush1.msra.mxu0 0.0
    %549 = vmatprep.subr.mxu0 0.0
    %550 = vmatpush1.msra.mxu0 0.0
    %551 = vmatprep.subr.mxu0 0.0
    %552 = vmatpush1.msra.mxu0 0.0
    %553 = vmatprep.subr.mxu0 0.0
    %554 = vmatpush1.msra.mxu0 0.0
    %555 = vmatprep.subr.mxu0 0.0
    %556 = vmatpush1.msra.mxu0 0.0
    %557 = vmatprep.subr.mxu0 0.0
    %558 = vmatpush1.msra.mxu0 0.0
    %559 = vmatprep.subr.mxu0 0.0
    %560 = vmatpush1.msra.mxu0 %v524
    %561 = vmatprep.subr.mxu0 0.0
    %562 = vmatpush1.msra.mxu0 %v523
    %563 = vmatprep.subr.mxu0 0.0
    %564 = vmatpush2.msra.mxu0 0.0
    %565 = vmatprep.subr.mxu0 0.0
    %566 = vmatpush2.msra.mxu0 0.0
    %567 = vmatprep.subr.mxu0 0.0
    %568 = vmatpush2.msra.mxu0 0.0
    %569 = vmatprep.subr.mxu0 0.0
    %570 = vmatpush2.msra.mxu0 0.0
    %571 = vmatprep.subr.mxu0 0.0
    %572 = vmatpush2.msra.mxu0 0.0
    %573 = vmatprep.subr.mxu0 0.0
    %574 = vmatpush2.msra.mxu0 0.0
    %575 = vmatprep.subr.mxu0 0.0
    %576 = vmatpush2.msra.mxu0 0.0
    %577 = vmatprep.subr.mxu0 0.0
    %578 = vmatpush2.msra.mxu0 0.0
    %579 = vmatprep.subr.mxu0 0.0
    %580 = vmatpush2.msra.mxu0 0.0
    %581 = vmatprep.subr.mxu0 0.0
    %582 = vmatpush2.msra.mxu0 0.0
    %583 = vmatprep.subr.mxu0 0.0
    %584 = vmatpush2.msra.mxu0 0.0
    %585 = vmatprep.subr.mxu0 0.0
    %586 = vmatpush2.msra.mxu0 0.0
    %587 = vmatprep.subr.mxu0 0.0
    %588 = vmatpush2.msra.mxu0 0.0
    %589 = vmatprep.subr.mxu0 0.0
    %590 = vmatpush2.msra.mxu0 0.0
    %591 = vmatprep.subr.mxu0 0.0
    %592 = vmatpush2.msra.mxu0 0.0
    %593 = vmatprep.subr.mxu0 0.0
    %594 = vmatpush2.msra.mxu0 0.0
    %595 = vmatprep.mubr.f32.mxu0 0.0
    %596 = vmatmul.mubr.f32.gmra.mxu0 %v526
    %v597 = vpop.f32.mrf.mxu0
    %v598 = vadd.f32 0.0, %v597
    %v599 = vpop.f32.mrf.mxu0
    %600 = vmatprep.mubr.f32.mxu0 0.0
    %601 = vmatmul.mubr.f32.gmra.mxu0 %v529
    %v602 = vpop.f32.mrf.mxu0
    %v603 = vadd.f32 0.0, %v602
    %v604 = vpop.f32.mrf.mxu0
    %605 = vdwg.mxu0
    %v607 = vsel %vm154, %v598, 0
    %v610 = vsel %vm154, %v603, 0
    %612 = vmatprep.subr.mxu0 0.0
    %613 = vmatpush1.msra.mxu0 0.0
    %614 = vmatprep.subr.mxu0 0.0
    %615 = vmatpush1.msra.mxu0 0.0
    %616 = vmatprep.subr.mxu0 0.0
    %617 = vmatpush1.msra.mxu0 0.0
    %618 = vmatprep.subr.mxu0 0.0
    %619 = vmatpush1.msra.mxu0 0.0
    %620 = vmatprep.subr.mxu0 0.0
    %621 = vmatpush1.msra.mxu0 0.0
    %622 = vmatprep.subr.mxu0 0.0
    %623 = vmatpush1.msra.mxu0 0.0
    %624 = vmatprep.subr.mxu0 0.0
    %625 = vmatpush1.msra.mxu0 0.0
    %626 = vmatprep.subr.mxu0 0.0
    %627 = vmatpush1.msra.mxu0 0.0
    %628 = vmatprep.subr.mxu0 0.0
    %629 = vmatpush1.msra.mxu0 0.0
    %630 = vmatprep.subr.mxu0 0.0
    %631 = vmatpush1.msra.mxu0 0.0
    %632 = vmatprep.subr.mxu0 0.0
    %633 = vmatpush1.msra.mxu0 0.0
    %634 = vmatprep.subr.mxu0 0.0
    %635 = vmatpush1.msra.mxu0 0.0
    %636 = vmatprep.subr.mxu0 0.0
    %637 = vmatpush1.msra.mxu0 0.0
    %638 = vmatprep.subr.mxu0 0.0
    %639 = vmatpush1.msra.mxu0 0.0
    %640 = vmatprep.subr.mxu0 0.0
    %641 = vmatpush1.msra.mxu0 %v524
    %642 = vmatprep.subr.mxu0 0.0
    %643 = vmatpush1.msra.mxu0 %v523
    %644 = vmatprep.subr.mxu0 0.0
    %645 = vmatpush2.msra.mxu0 0.0
    %646 = vmatprep.subr.mxu0 0.0
    %647 = vmatpush2.msra.mxu0 0.0
    %648 = vmatprep.subr.mxu0 0.0
    %649 = vmatpush2.msra.mxu0 0.0
    %650 = vmatprep.subr.mxu0 0.0
    %651 = vmatpush2.msra.mxu0 0.0
    %652 = vmatprep.subr.mxu0 0.0
    %653 = vmatpush2.msra.mxu0 0.0
    %654 = vmatprep.subr.mxu0 0.0
    %655 = vmatpush2.msra.mxu0 0.0
    %656 = vmatprep.subr.mxu0 0.0
    %657 = vmatpush2.msra.mxu0 0.0
    %658 = vmatprep.subr.mxu0 0.0
    %659 = vmatpush2.msra.mxu0 0.0
    %660 = vmatprep.subr.mxu0 0.0
    %661 = vmatpush2.msra.mxu0 0.0
    %662 = vmatprep.subr.mxu0 0.0
    %663 = vmatpush2.msra.mxu0 0.0
    %664 = vmatprep.subr.mxu0 0.0
    %665 = vmatpush2.msra.mxu0 0.0
    %666 = vmatprep.subr.mxu0 0.0
    %667 = vmatpush2.msra.mxu0 0.0
    %668 = vmatprep.subr.mxu0 0.0
    %669 = vmatpush2.msra.mxu0 0.0
    %670 = vmatprep.subr.mxu0 0.0
    %671 = vmatpush2.msra.mxu0 0.0
    %672 = vmatprep.subr.mxu0 0.0
    %673 = vmatpush2.msra.mxu0 0.0
    %674 = vmatprep.subr.mxu0 0.0
    %675 = vmatpush2.msra.mxu0 0.0
    %676 = vmatprep.mubr.f32.mxu0 0.0
    %677 = vmatmul.mubr.f32.gmra.mxu0 %v607
    %v678 = vpop.f32.mrf.mxu0
    %v679 = vadd.f32 0.0, %v678
    %v680 = vpop.f32.mrf.mxu0
    %681 = vmatprep.mubr.f32.mxu0 0.0
    %682 = vmatmul.mubr.f32.gmra.mxu0 %v610
    %v683 = vpop.f32.mrf.mxu0
    %v684 = vadd.f32 0.0, %v683
    %v685 = vpop.f32.mrf.mxu0
    %686 = vdwg.mxu0
    %v687 = vmul.f32 %v523, 1.5
    %v688 = vmul.f32 %v524, 1.5
    %v690 = vsel %vm154, %v679, 0
    %v693 = vsel %vm154, %v684, 0
    %695 = vmatprep.subr.mxu0 0.0
    %696 = vmatpush1.msra.mxu0 0.0
    %697 = vmatprep.subr.mxu0 0.0
    %698 = vmatpush1.msra.mxu0 0.0
    %699 = vmatprep.subr.mxu0 0.0
    %700 = vmatpush1.msra.mxu0 0.0
    %701 = vmatprep.subr.mxu0 0.0
    %702 = vmatpush1.msra.mxu0 0.0
    %703 = vmatprep.subr.mxu0 0.0
    %704 = vmatpush1.msra.mxu0 0.0
    %705 = vmatprep.subr.mxu0 0.0
    %706 = vmatpush1.msra.mxu0 0.0
    %707 = vmatprep.subr.mxu0 0.0
    %708 = vmatpush1.msra.mxu0 0.0
    %709 = vmatprep.subr.mxu0 0.0
    %710 = vmatpush1.msra.mxu0 0.0
    %711 = vmatprep.subr.mxu0 0.0
    %712 = vmatpush1.msra.mxu0 0.0
    %713 = vmatprep.subr.mxu0 0.0
    %714 = vmatpush1.msra.mxu0 0.0
    %715 = vmatprep.subr.mxu0 0.0
    %716 = vmatpush1.msra.mxu0 0.0
    %717 = vmatprep.subr.mxu0 0.0
    %718 = vmatpush1.msra.mxu0 0.0
    %719 = vmatprep.subr.mxu0 0.0
    %720 = vmatpush1.msra.mxu0 0.0
    %721 = vmatprep.subr.mxu0 0.0
    %722 = vmatpush1.msra.mxu0 0.0
    %723 = vmatprep.subr.mxu0 0.0
    %724 = vmatpush1.msra.mxu0 %v269
    %725 = vmatprep.subr.mxu0 0.0
    %726 = vmatpush1.msra.mxu0 %v268
    %727 = vmatprep.subr.mxu0 0.0
    %728 = vmatpush2.msra.mxu0 0.0
    %729 = vmatprep.subr.mxu0 0.0
    %730 = vmatpush2.msra.mxu0 0.0
    %731 = vmatprep.subr.mxu0 0.0
    %732 = vmatpush2.msra.mxu0 0.0
    %733 = vmatprep.subr.mxu0 0.0
    %734 = vmatpush2.msra.mxu0 0.0
    %735 = vmatprep.subr.mxu0 0.0
    %736 = vmatpush2.msra.mxu0 0.0
    %737 = vmatprep.subr.mxu0 0.0
    %738 = vmatpush2.msra.mxu0 0.0
    %739 = vmatprep.subr.mxu0 0.0
    %740 = vmatpush2.msra.mxu0 0.0
    %741 = vmatprep.subr.mxu0 0.0
    %742 = vmatpush2.msra.mxu0 0.0
    %743 = vmatprep.subr.mxu0 0.0
    %744 = vmatpush2.msra.mxu0 0.0
    %745 = vmatprep.subr.mxu0 0.0
    %746 = vmatpush2.msra.mxu0 0.0
    %747 = vmatprep.subr.mxu0 0.0
    %748 = vmatpush2.msra.mxu0 0.0
    %749 = vmatprep.subr.mxu0 0.0
    %750 = vmatpush2.msra.mxu0 0.0
    %751 = vmatprep.subr.mxu0 0.0
    %752 = vmatpush2.msra.mxu0 0.0
    %753 = vmatprep.subr.mxu0 0.0
    %754 = vmatpush2.msra.mxu0 0.0
    %755 = vmatprep.subr.mxu0 0.0
    %756 = vmatpush2.msra.mxu0 0.0
    %757 = vmatprep.subr.mxu0 0.0
    %758 = vmatpush2.msra.mxu0 0.0
    %759 = vmatprep.mubr.f32.mxu0 0.0
    %760 = vmatmul.mubr.f32.gmra.mxu0 %v690
    %v761 = vpop.f32.mrf.mxu0
    %v762 = vadd.f32 0.0, %v761
    %v763 = vpop.f32.mrf.mxu0
    %764 = vmatprep.mubr.f32.mxu0 0.0
    %765 = vmatmul.mubr.f32.gmra.mxu0 %v693
    %v766 = vpop.f32.mrf.mxu0
    %v767 = vadd.f32 0.0, %v766
    %v768 = vpop.f32.mrf.mxu0
    %769 = vdwg.mxu0
    %v770 = vmul.f32 %v762, 0.5
    %v771 = vmul.f32 %v767, 0.5
    %v772 = vsub.f32 %v687, %v770
    %v773 = vsub.f32 %v688, %v771
    %v775 = vsel %vm154, %v772, 0
    %v778 = vsel %vm154, %v773, 0
    %780 = vmatprep.subr.mxu0 0.0
    %781 = vmatpush1.msra.mxu0 0.0
    %782 = vmatprep.subr.mxu0 0.0
    %783 = vmatpush1.msra.mxu0 0.0
    %784 = vmatprep.subr.mxu0 0.0
    %785 = vmatpush1.msra.mxu0 0.0
    %786 = vmatprep.subr.mxu0 0.0
    %787 = vmatpush1.msra.mxu0 0.0
    %788 = vmatprep.subr.mxu0 0.0
    %789 = vmatpush1.msra.mxu0 0.0
    %790 = vmatprep.subr.mxu0 0.0
    %791 = vmatpush1.msra.mxu0 0.0
    %792 = vmatprep.subr.mxu0 0.0
    %793 = vmatpush1.msra.mxu0 0.0
    %794 = vmatprep.subr.mxu0 0.0
    %795 = vmatpush1.msra.mxu0 0.0
    %796 = vmatprep.subr.mxu0 0.0
    %797 = vmatpush1.msra.mxu0 0.0
    %798 = vmatprep.subr.mxu0 0.0
    %799 = vmatpush1.msra.mxu0 0.0
    %800 = vmatprep.subr.mxu0 0.0
    %801 = vmatpush1.msra.mxu0 0.0
    %802 = vmatprep.subr.mxu0 0.0
    %803 = vmatpush1.msra.mxu0 0.0
    %804 = vmatprep.subr.mxu0 0.0
    %805 = vmatpush1.msra.mxu0 0.0
    %806 = vmatprep.subr.mxu0 0.0
    %807 = vmatpush1.msra.mxu0 0.0
    %808 = vmatprep.subr.mxu0 0.0
    %809 = vmatpush1.msra.mxu0 %v773
    %810 = vmatprep.subr.mxu0 0.0
    %811 = vmatpush1.msra.mxu0 %v772
    %812 = vmatprep.subr.mxu0 0.0
    %813 = vmatpush2.msra.mxu0 0.0
    %814 = vmatprep.subr.mxu0 0.0
    %815 = vmatpush2.msra.mxu0 0.0
    %816 = vmatprep.subr.mxu0 0.0
    %817 = vmatpush2.msra.mxu0 0.0
    %818 = vmatprep.subr.mxu0 0.0
    %819 = vmatpush2.msra.mxu0 0.0
    %820 = vmatprep.subr.mxu0 0.0
    %821 = vmatpush2.msra.mxu0 0.0
    %822 = vmatprep.subr.mxu0 0.0
    %823 = vmatpush2.msra.mxu0 0.0
    %824 = vmatprep.subr.mxu0 0.0
    %825 = vmatpush2.msra.mxu0 0.0
    %826 = vmatprep.subr.mxu0 0.0
    %827 = vmatpush2.msra.mxu0 0.0
    %828 = vmatprep.subr.mxu0 0.0
    %829 = vmatpush2.msra.mxu0 0.0
    %830 = vmatprep.subr.mxu0 0.0
    %831 = vmatpush2.msra.mxu0 0.0
    %832 = vmatprep.subr.mxu0 0.0
    %833 = vmatpush2.msra.mxu0 0.0
    %834 = vmatprep.subr.mxu0 0.0
    %835 = vmatpush2.msra.mxu0 0.0
    %836 = vmatprep.subr.mxu0 0.0
    %837 = vmatpush2.msra.mxu0 0.0
    %838 = vmatprep.subr.mxu0 0.0
    %839 = vmatpush2.msra.mxu0 0.0
    %840 = vmatprep.subr.mxu0 0.0
    %841 = vmatpush2.msra.mxu0 0.0
    %842 = vmatprep.subr.mxu0 0.0
    %843 = vmatpush2.msra.mxu0 0.0
    %844 = vmatprep.mubr.f32.mxu0 0.0
    %845 = vmatmul.mubr.f32.gmra.mxu0 %v775
    %v846 = vpop.f32.mrf.mxu0
    %v847 = vadd.f32 0.0, %v846
    %v848 = vpop.f32.mrf.mxu0
    %849 = vmatprep.mubr.f32.mxu0 0.0
    %850 = vmatmul.mubr.f32.gmra.mxu0 %v778
    %v851 = vpop.f32.mrf.mxu0
    %v852 = vadd.f32 0.0, %v851
    %v853 = vpop.f32.mrf.mxu0
    %854 = vdwg.mxu0
    %v856 = vsel %vm154, %v847, 0
    %v859 = vsel %vm154, %v852, 0
    %861 = vmatprep.subr.mxu0 0.0
    %862 = vmatpush1.msra.mxu0 0.0
    %863 = vmatprep.subr.mxu0 0.0
    %864 = vmatpush1.msra.mxu0 0.0
    %865 = vmatprep.subr.mxu0 0.0
    %866 = vmatpush1.msra.mxu0 0.0
    %867 = vmatprep.subr.mxu0 0.0
    %868 = vmatpush1.msra.mxu0 0.0
    %869 = vmatprep.subr.mxu0 0.0
    %870 = vmatpush1.msra.mxu0 0.0
    %871 = vmatprep.subr.mxu0 0.0
    %872 = vmatpush1.msra.mxu0 0.0
    %873 = vmatprep.subr.mxu0 0.0
    %874 = vmatpush1.msra.mxu0 0.0
    %875 = vmatprep.subr.mxu0 0.0
    %876 = vmatpush1.msra.mxu0 0.0
    %877 = vmatprep.subr.mxu0 0.0
    %878 = vmatpush1.msra.mxu0 0.0
    %879 = vmatprep.subr.mxu0 0.0
    %880 = vmatpush1.msra.mxu0 0.0
    %881 = vmatprep.subr.mxu0 0.0
    %882 = vmatpush1.msra.mxu0 0.0
    %883 = vmatprep.subr.mxu0 0.0
    %884 = vmatpush1.msra.mxu0 0.0
    %885 = vmatprep.subr.mxu0 0.0
    %886 = vmatpush1.msra.mxu0 0.0
    %887 = vmatprep.subr.mxu0 0.0
    %888 = vmatpush1.msra.mxu0 0.0
    %889 = vmatprep.subr.mxu0 0.0
    %890 = vmatpush1.msra.mxu0 %v773
    %891 = vmatprep.subr.mxu0 0.0
    %892 = vmatpush1.msra.mxu0 %v772
    %893 = vmatprep.subr.mxu0 0.0
    %894 = vmatpush2.msra.mxu0 0.0
    %895 = vmatprep.subr.mxu0 0.0
    %896 = vmatpush2.msra.mxu0 0.0
    %897 = vmatprep.subr.mxu0 0.0
    %898 = vmatpush2.msra.mxu0 0.0
    %899 = vmatprep.subr.mxu0 0.0
    %900 = vmatpush2.msra.mxu0 0.0
    %901 = vmatprep.subr.mxu0 0.0
    %902 = vmatpush2.msra.mxu0 0.0
    %903 = vmatprep.subr.mxu0 0.0
    %904 = vmatpush2.msra.mxu0 0.0
    %905 = vmatprep.subr.mxu0 0.0
    %906 = vmatpush2.msra.mxu0 0.0
    %907 = vmatprep.subr.mxu0 0.0
    %908 = vmatpush2.msra.mxu0 0.0
    %909 = vmatprep.subr.mxu0 0.0
    %910 = vmatpush2.msra.mxu0 0.0
    %911 = vmatprep.subr.mxu0 0.0
    %912 = vmatpush2.msra.mxu0 0.0
    %913 = vmatprep.subr.mxu0 0.0
    %914 = vmatpush2.msra.mxu0 0.0
    %915 = vmatprep.subr.mxu0 0.0
    %916 = vmatpush2.msra.mxu0 0.0
    %917 = vmatprep.subr.mxu0 0.0
    %918 = vmatpush2.msra.mxu0 0.0
    %919 = vmatprep.subr.mxu0 0.0
    %920 = vmatpush2.msra.mxu0 0.0
    %921 = vmatprep.subr.mxu0 0.0
    %922 = vmatpush2.msra.mxu0 0.0
    %923 = vmatprep.subr.mxu0 0.0
    %924 = vmatpush2.msra.mxu0 0.0
    %925 = vmatprep.mubr.f32.mxu0 0.0
    %926 = vmatmul.mubr.f32.gmra.mxu0 %v856
    %v927 = vpop.f32.mrf.mxu0
    %v928 = vadd.f32 0.0, %v927
    %v929 = vpop.f32.mrf.mxu0
    %930 = vmatprep.mubr.f32.mxu0 0.0
    %931 = vmatmul.mubr.f32.gmra.mxu0 %v859
    %v932 = vpop.f32.mrf.mxu0
    %v933 = vadd.f32 0.0, %v932
    %v934 = vpop.f32.mrf.mxu0
    %935 = vdwg.mxu0
    %v936 = vmul.f32 %v772, 1.5
    %v937 = vmul.f32 %v773, 1.5
    %v939 = vsel %vm154, %v928, 0
    %v942 = vsel %vm154, %v933, 0
    %944 = vmatprep.subr.mxu0 0.0
    %945 = vmatpush1.msra.mxu0 0.0
    %946 = vmatprep.subr.mxu0 0.0
    %947 = vmatpush1.msra.mxu0 0.0
    %948 = vmatprep.subr.mxu0 0.0
    %949 = vmatpush1.msra.mxu0 0.0
    %950 = vmatprep.subr.mxu0 0.0
    %951 = vmatpush1.msra.mxu0 0.0
    %952 = vmatprep.subr.mxu0 0.0
    %953 = vmatpush1.msra.mxu0 0.0
    %954 = vmatprep.subr.mxu0 0.0
    %955 = vmatpush1.msra.mxu0 0.0
    %956 = vmatprep.subr.mxu0 0.0
    %957 = vmatpush1.msra.mxu0 0.0
    %958 = vmatprep.subr.mxu0 0.0
    %959 = vmatpush1.msra.mxu0 0.0
    %960 = vmatprep.subr.mxu0 0.0
    %961 = vmatpush1.msra.mxu0 0.0
    %962 = vmatprep.subr.mxu0 0.0
    %963 = vmatpush1.msra.mxu0 0.0
    %964 = vmatprep.subr.mxu0 0.0
    %965 = vmatpush1.msra.mxu0 0.0
    %966 = vmatprep.subr.mxu0 0.0
    %967 = vmatpush1.msra.mxu0 0.0
    %968 = vmatprep.subr.mxu0 0.0
    %969 = vmatpush1.msra.mxu0 0.0
    %970 = vmatprep.subr.mxu0 0.0
    %971 = vmatpush1.msra.mxu0 0.0
    %972 = vmatprep.subr.mxu0 0.0
    %973 = vmatpush1.msra.mxu0 %v269
    %974 = vmatprep.subr.mxu0 0.0
    %975 = vmatpush1.msra.mxu0 %v268
    %976 = vmatprep.subr.mxu0 0.0
    %977 = vmatpush2.msra.mxu0 0.0
    %978 = vmatprep.subr.mxu0 0.0
    %979 = vmatpush2.msra.mxu0 0.0
    %980 = vmatprep.subr.mxu0 0.0
    %981 = vmatpush2.msra.mxu0 0.0
    %982 = vmatprep.subr.mxu0 0.0
    %983 = vmatpush2.msra.mxu0 0.0
    %984 = vmatprep.subr.mxu0 0.0
    %985 = vmatpush2.msra.mxu0 0.0
    %986 = vmatprep.subr.mxu0 0.0
    %987 = vmatpush2.msra.mxu0 0.0
    %988 = vmatprep.subr.mxu0 0.0
    %989 = vmatpush2.msra.mxu0 0.0
    %990 = vmatprep.subr.mxu0 0.0
    %991 = vmatpush2.msra.mxu0 0.0
    %992 = vmatprep.subr.mxu0 0.0
    %993 = vmatpush2.msra.mxu0 0.0
    %994 = vmatprep.subr.mxu0 0.0
    %995 = vmatpush2.msra.mxu0 0.0
    %996 = vmatprep.subr.mxu0 0.0
    %997 = vmatpush2.msra.mxu0 0.0
    %998 = vmatprep.subr.mxu0 0.0
    %999 = vmatpush2.msra.mxu0 0.0
    %1000 = vmatprep.subr.mxu0 0.0
    %1001 = vmatpush2.msra.mxu0 0.0
    %1002 = vmatprep.subr.mxu0 0.0
    %1003 = vmatpush2.msra.mxu0 0.0
    %1004 = vmatprep.subr.mxu0 0.0
    %1005 = vmatpush2.msra.mxu0 0.0
    %1006 = vmatprep.subr.mxu0 0.0
    %1007 = vmatpush2.msra.mxu0 0.0
    %1008 = vmatprep.mubr.f32.mxu0 0.0
    %1009 = vmatmul.mubr.f32.gmra.mxu0 %v939
    %v1010 = vpop.f32.mrf.mxu0
    %v1011 = vadd.f32 0.0, %v1010
    %v1012 = vpop.f32.mrf.mxu0
    %1013 = vmatprep.mubr.f32.mxu0 0.0
    %1014 = vmatmul.mubr.f32.gmra.mxu0 %v942
    %v1015 = vpop.f32.mrf.mxu0
    %v1016 = vadd.f32 0.0, %v1015
    %v1017 = vpop.f32.mrf.mxu0
    %1018 = vdwg.mxu0
    %v1019 = vmul.f32 %v1011, 0.5
    %v1020 = vmul.f32 %v1016, 0.5
    %v1021 = vsub.f32 %v936, %v1019
    %v1022 = vsub.f32 %v937, %v1020
    %v1024 = vsel %vm154, %v1021, 0
    %v1027 = vsel %vm154, %v1022, 0
    %1029 = vmatprep.subr.mxu0 0.0
    %1030 = vmatpush1.msra.mxu0 0.0
    %1031 = vmatprep.subr.mxu0 0.0
    %1032 = vmatpush1.msra.mxu0 0.0
    %1033 = vmatprep.subr.mxu0 0.0
    %1034 = vmatpush1.msra.mxu0 0.0
    %1035 = vmatprep.subr.mxu0 0.0
    %1036 = vmatpush1.msra.mxu0 0.0
    %1037 = vmatprep.subr.mxu0 0.0
    %1038 = vmatpush1.msra.mxu0 0.0
    %1039 = vmatprep.subr.mxu0 0.0
    %1040 = vmatpush1.msra.mxu0 0.0
    %1041 = vmatprep.subr.mxu0 0.0
    %1042 = vmatpush1.msra.mxu0 0.0
    %1043 = vmatprep.subr.mxu0 0.0
    %1044 = vmatpush1.msra.mxu0 0.0
    %1045 = vmatprep.subr.mxu0 0.0
    %1046 = vmatpush1.msra.mxu0 0.0
    %1047 = vmatprep.subr.mxu0 0.0
    %1048 = vmatpush1.msra.mxu0 0.0
    %1049 = vmatprep.subr.mxu0 0.0
    %1050 = vmatpush1.msra.mxu0 0.0
    %1051 = vmatprep.subr.mxu0 0.0
    %1052 = vmatpush1.msra.mxu0 0.0
    %1053 = vmatprep.subr.mxu0 0.0
    %1054 = vmatpush1.msra.mxu0 0.0
    %1055 = vmatprep.subr.mxu0 0.0
    %1056 = vmatpush1.msra.mxu0 0.0
    %1057 = vmatprep.subr.mxu0 0.0
    %1058 = vmatpush1.msra.mxu0 %v1022
    %1059 = vmatprep.subr.mxu0 0.0
    %1060 = vmatpush1.msra.mxu0 %v1021
    %1061 = vmatprep.subr.mxu0 0.0
    %1062 = vmatpush2.msra.mxu0 0.0
    %1063 = vmatprep.subr.mxu0 0.0
    %1064 = vmatpush2.msra.mxu0 0.0
    %1065 = vmatprep.subr.mxu0 0.0
    %1066 = vmatpush2.msra.mxu0 0.0
    %1067 = vmatprep.subr.mxu0 0.0
    %1068 = vmatpush2.msra.mxu0 0.0
    %1069 = vmatprep.subr.mxu0 0.0
    %1070 = vmatpush2.msra.mxu0 0.0
    %1071 = vmatprep.subr.mxu0 0.0
    %1072 = vmatpush2.msra.mxu0 0.0
    %1073 = vmatprep.subr.mxu0 0.0
    %1074 = vmatpush2.msra.mxu0 0.0
    %1075 = vmatprep.subr.mxu0 0.0
    %1076 = vmatpush2.msra.mxu0 0.0
    %1077 = vmatprep.subr.mxu0 0.0
    %1078 = vmatpush2.msra.mxu0 0.0
    %1079 = vmatprep.subr.mxu0 0.0
    %1080 = vmatpush2.msra.mxu0 0.0
    %1081 = vmatprep.subr.mxu0 0.0
    %1082 = vmatpush2.msra.mxu0 0.0
    %1083 = vmatprep.subr.mxu0 0.0
    %1084 = vmatpush2.msra.mxu0 0.0
    %1085 = vmatprep.subr.mxu0 0.0
    %1086 = vmatpush2.msra.mxu0 0.0
    %1087 = vmatprep.subr.mxu0 0.0
    %1088 = vmatpush2.msra.mxu0 0.0
    %1089 = vmatprep.subr.mxu0 0.0
    %1090 = vmatpush2.msra.mxu0 0.0
    %1091 = vmatprep.subr.mxu0 0.0
    %1092 = vmatpush2.msra.mxu0 0.0
    %1093 = vmatprep.mubr.f32.mxu0 0.0
    %1094 = vmatmul.mubr.f32.gmra.mxu0 %v1024
    %v1095 = vpop.f32.mrf.mxu0
    %v1096 = vadd.f32 0.0, %v1095
    %v1097 = vpop.f32.mrf.mxu0
    %1098 = vmatprep.mubr.f32.mxu0 0.0
    %1099 = vmatmul.mubr.f32.gmra.mxu0 %v1027
    %v1100 = vpop.f32.mrf.mxu0
    %v1101 = vadd.f32 0.0, %v1100
    %v1102 = vpop.f32.mrf.mxu0
    %1103 = vdwg.mxu0
    %v1105 = vsel %vm154, %v1096, 0
    %v1108 = vsel %vm154, %v1101, 0
    %1110 = vmatprep.subr.mxu0 0.0
    %1111 = vmatpush1.msra.mxu0 0.0
    %1112 = vmatprep.subr.mxu0 0.0
    %1113 = vmatpush1.msra.mxu0 0.0
    %1114 = vmatprep.subr.mxu0 0.0
    %1115 = vmatpush1.msra.mxu0 0.0
    %1116 = vmatprep.subr.mxu0 0.0
    %1117 = vmatpush1.msra.mxu0 0.0
    %1118 = vmatprep.subr.mxu0 0.0
    %1119 = vmatpush1.msra.mxu0 0.0
    %1120 = vmatprep.subr.mxu0 0.0
    %1121 = vmatpush1.msra.mxu0 0.0
    %1122 = vmatprep.subr.mxu0 0.0
    %1123 = vmatpush1.msra.mxu0 0.0
    %1124 = vmatprep.subr.mxu0 0.0
    %1125 = vmatpush1.msra.mxu0 0.0
    %1126 = vmatprep.subr.mxu0 0.0
    %1127 = vmatpush1.msra.mxu0 0.0
    %1128 = vmatprep.subr.mxu0 0.0
    %1129 = vmatpush1.msra.mxu0 0.0
    %1130 = vmatprep.subr.mxu0 0.0
    %1131 = vmatpush1.msra.mxu0 0.0
    %1132 = vmatprep.subr.mxu0 0.0
    %1133 = vmatpush1.msra.mxu0 0.0
    %1134 = vmatprep.subr.mxu0 0.0
    %1135 = vmatpush1.msra.mxu0 0.0
    %1136 = vmatprep.subr.mxu0 0.0
    %1137 = vmatpush1.msra.mxu0 0.0
    %1138 = vmatprep.subr.mxu0 0.0
    %1139 = vmatpush1.msra.mxu0 %v1022
    %1140 = vmatprep.subr.mxu0 0.0
    %1141 = vmatpush1.msra.mxu0 %v1021
    %1142 = vmatprep.subr.mxu0 0.0
    %1143 = vmatpush2.msra.mxu0 0.0
    %1144 = vmatprep.subr.mxu0 0.0
    %1145 = vmatpush2.msra.mxu0 0.0
    %1146 = vmatprep.subr.mxu0 0.0
    %1147 = vmatpush2.msra.mxu0 0.0
    %1148 = vmatprep.subr.mxu0 0.0
    %1149 = vmatpush2.msra.mxu0 0.0
    %1150 = vmatprep.subr.mxu0 0.0
    %1151 = vmatpush2.msra.mxu0 0.0
    %1152 = vmatprep.subr.mxu0 0.0
    %1153 = vmatpush2.msra.mxu0 0.0
    %1154 = vmatprep.subr.mxu0 0.0
    %1155 = vmatpush2.msra.mxu0 0.0
    %1156 = vmatprep.subr.mxu0 0.0
    %1157 = vmatpush2.msra.mxu0 0.0
    %1158 = vmatprep.subr.mxu0 0.0
    %1159 = vmatpush2.msra.mxu0 0.0
    %1160 = vmatprep.subr.mxu0 0.0
    %1161 = vmatpush2.msra.mxu0 0.0
    %1162 = vmatprep.subr.mxu0 0.0
    %1163 = vmatpush2.msra.mxu0 0.0
    %1164 = vmatprep.subr.mxu0 0.0
    %1165 = vmatpush2.msra.mxu0 0.0
    %1166 = vmatprep.subr.mxu0 0.0
    %1167 = vmatpush2.msra.mxu0 0.0
    %1168 = vmatprep.subr.mxu0 0.0
    %1169 = vmatpush2.msra.mxu0 0.0
    %1170 = vmatprep.subr.mxu0 0.0
    %1171 = vmatpush2.msra.mxu0 0.0
    %1172 = vmatprep.subr.mxu0 0.0
    %1173 = vmatpush2.msra.mxu0 0.0
    %1174 = vmatprep.mubr.f32.mxu0 0.0
    %1175 = vmatmul.mubr.f32.gmra.mxu0 %v1105
    %v1176 = vpop.f32.mrf.mxu0
    %v1177 = vadd.f32 0.0, %v1176
    %v1178 = vpop.f32.mrf.mxu0
    %1179 = vmatprep.mubr.f32.mxu0 0.0
    %1180 = vmatmul.mubr.f32.gmra.mxu0 %v1108
    %v1181 = vpop.f32.mrf.mxu0
    %v1182 = vadd.f32 0.0, %v1181
    %v1183 = vpop.f32.mrf.mxu0
    %1184 = vdwg.mxu0
    %v1185 = vmul.f32 %v1021, 1.5
    %v1186 = vmul.f32 %v1022, 1.5
    %v1188 = vsel %vm154, %v1177, 0
    %v1191 = vsel %vm154, %v1182, 0
    %1193 = vmatprep.subr.mxu0 0.0
    %1194 = vmatpush1.msra.mxu0 0.0
    %1195 = vmatprep.subr.mxu0 0.0
    %1196 = vmatpush1.msra.mxu0 0.0
    %1197 = vmatprep.subr.mxu0 0.0
    %1198 = vmatpush1.msra.mxu0 0.0
    %1199 = vmatprep.subr.mxu0 0.0
    %1200 = vmatpush1.msra.mxu0 0.0
    %1201 = vmatprep.subr.mxu0 0.0
    %1202 = vmatpush1.msra.mxu0 0.0
    %1203 = vmatprep.subr.mxu0 0.0
    %1204 = vmatpush1.msra.mxu0 0.0
    %1205 = vmatprep.subr.mxu0 0.0
    %1206 = vmatpush1.msra.mxu0 0.0
    %1207 = vmatprep.subr.mxu0 0.0
    %1208 = vmatpush1.msra.mxu0 0.0
    %1209 = vmatprep.subr.mxu0 0.0
    %1210 = vmatpush1.msra.mxu0 0.0
    %1211 = vmatprep.subr.mxu0 0.0
    %1212 = vmatpush1.msra.mxu0 0.0
    %1213 = vmatprep.subr.mxu0 0.0
    %1214 = vmatpush1.msra.mxu0 0.0
    %1215 = vmatprep.subr.mxu0 0.0
    %1216 = vmatpush1.msra.mxu0 0.0
    %1217 = vmatprep.subr.mxu0 0.0
    %1218 = vmatpush1.msra.mxu0 0.0
    %1219 = vmatprep.subr.mxu0 0.0
    %1220 = vmatpush1.msra.mxu0 0.0
    %1221 = vmatprep.subr.mxu0 0.0
    %1222 = vmatpush1.msra.mxu0 %v269
    %1223 = vmatprep.subr.mxu0 0.0
    %1224 = vmatpush1.msra.mxu0 %v268
    %1225 = vmatprep.subr.mxu0 0.0
    %1226 = vmatpush2.msra.mxu0 0.0
    %1227 = vmatprep.subr.mxu0 0.0
    %1228 = vmatpush2.msra.mxu0 0.0
    %1229 = vmatprep.subr.mxu0 0.0
    %1230 = vmatpush2.msra.mxu0 0.0
    %1231 = vmatprep.subr.mxu0 0.0
    %1232 = vmatpush2.msra.mxu0 0.0
    %1233 = vmatprep.subr.mxu0 0.0
    %1234 = vmatpush2.msra.mxu0 0.0
    %1235 = vmatprep.subr.mxu0 0.0
    %1236 = vmatpush2.msra.mxu0 0.0
    %1237 = vmatprep.subr.mxu0 0.0
    %1238 = vmatpush2.msra.mxu0 0.0
    %1239 = vmatprep.subr.mxu0 0.0
    %1240 = vmatpush2.msra.mxu0 0.0
    %1241 = vmatprep.subr.mxu0 0.0
    %1242 = vmatpush2.msra.mxu0 0.0
    %1243 = vmatprep.subr.mxu0 0.0
    %1244 = vmatpush2.msra.mxu0 0.0
    %1245 = vmatprep.subr.mxu0 0.0
    %1246 = vmatpush2.msra.mxu0 0.0
    %1247 = vmatprep.subr.mxu0 0.0
    %1248 = vmatpush2.msra.mxu0 0.0
    %1249 = vmatprep.subr.mxu0 0.0
    %1250 = vmatpush2.msra.mxu0 0.0
    %1251 = vmatprep.subr.mxu0 0.0
    %1252 = vmatpush2.msra.mxu0 0.0
    %1253 = vmatprep.subr.mxu0 0.0
    %1254 = vmatpush2.msra.mxu0 0.0
    %1255 = vmatprep.subr.mxu0 0.0
    %1256 = vmatpush2.msra.mxu0 0.0
    %1257 = vmatprep.mubr.f32.mxu0 0.0
    %1258 = vmatmul.mubr.f32.gmra.mxu0 %v1188
    %v1259 = vpop.f32.mrf.mxu0
    %v1260 = vadd.f32 0.0, %v1259
    %v1261 = vpop.f32.mrf.mxu0
    %1262 = vmatprep.mubr.f32.mxu0 0.0
    %1263 = vmatmul.mubr.f32.gmra.mxu0 %v1191
    %v1264 = vpop.f32.mrf.mxu0
    %v1265 = vadd.f32 0.0, %v1264
    %v1266 = vpop.f32.mrf.mxu0
    %1267 = vdwg.mxu0
    %v1268 = vmul.f32 %v1260, 0.5
    %v1269 = vmul.f32 %v1265, 0.5
    %v1270 = vsub.f32 %v1185, %v1268
    %v1271 = vsub.f32 %v1186, %v1269
    %1273 = vset.pattern.permute.xlu0 0
    %1274 = vperm.xlu0 %1273, %v250
    %v1275 = vpop.permute.xlu0 %1274
    %1278 = vset.pattern.permute.xlu0 0
    %1279 = vperm.xlu0 %1278, %v257
    %v1280 = vpop.permute.xlu0 %1279
    %v1282 = vmul.f32 %v1270, %v1275
    %v1283 = vmul.f32 %v1271, %v1280
    %v1285 = vsel %vm154, %v1282, 0
    %v1288 = vsel %vm154, %v1283, 0
    %1290 = vmatprep.subr.mxu0 0.0
    %1291 = vmatpush1.msra.mxu0 0.0
    %1292 = vmatprep.subr.mxu0 0.0
    %1293 = vmatpush1.msra.mxu0 0.0
    %1294 = vmatprep.subr.mxu0 0.0
    %1295 = vmatpush1.msra.mxu0 0.0
    %1296 = vmatprep.subr.mxu0 0.0
    %1297 = vmatpush1.msra.mxu0 0.0
    %1298 = vmatprep.subr.mxu0 0.0
    %1299 = vmatpush1.msra.mxu0 0.0
    %1300 = vmatprep.subr.mxu0 0.0
    %1301 = vmatpush1.msra.mxu0 0.0
    %1302 = vmatprep.subr.mxu0 0.0
    %1303 = vmatpush1.msra.mxu0 0.0
    %1304 = vmatprep.subr.mxu0 0.0
    %1305 = vmatpush1.msra.mxu0 0.0
    %1306 = vmatprep.subr.mxu0 0.0
    %1307 = vmatpush1.msra.mxu0 0.0
    %1308 = vmatprep.subr.mxu0 0.0
    %1309 = vmatpush1.msra.mxu0 0.0
    %1310 = vmatprep.subr.mxu0 0.0
    %1311 = vmatpush1.msra.mxu0 0.0
    %1312 = vmatprep.subr.mxu0 0.0
    %1313 = vmatpush1.msra.mxu0 0.0
    %1314 = vmatprep.subr.mxu0 0.0
    %1315 = vmatpush1.msra.mxu0 0.0
    %1316 = vmatprep.subr.mxu0 0.0
    %1317 = vmatpush1.msra.mxu0 0.0
    %1318 = vmatprep.subr.mxu0 0.0
    %1319 = vmatpush1.msra.mxu0 %v35
    %1320 = vmatprep.subr.mxu0 0.0
    %1321 = vmatpush1.msra.mxu0 %v34
    %1322 = vmatprep.subr.mxu0 0.0
    %1323 = vmatpush2.msra.mxu0 0.0
    %1324 = vmatprep.subr.mxu0 0.0
    %1325 = vmatpush2.msra.mxu0 0.0
    %1326 = vmatprep.subr.mxu0 0.0
    %1327 = vmatpush2.msra.mxu0 0.0
    %1328 = vmatprep.subr.mxu0 0.0
    %1329 = vmatpush2.msra.mxu0 0.0
    %1330 = vmatprep.subr.mxu0 0.0
    %1331 = vmatpush2.msra.mxu0 0.0
    %1332 = vmatprep.subr.mxu0 0.0
    %1333 = vmatpush2.msra.mxu0 0.0
    %1334 = vmatprep.subr.mxu0 0.0
    %1335 = vmatpush2.msra.mxu0 0.0
    %1336 = vmatprep.subr.mxu0 0.0
    %1337 = vmatpush2.msra.mxu0 0.0
    %1338 = vmatprep.subr.mxu0 0.0
    %1339 = vmatpush2.msra.mxu0 0.0
    %1340 = vmatprep.subr.mxu0 0.0
    %1341 = vmatpush2.msra.mxu0 0.0
    %1342 = vmatprep.subr.mxu0 0.0
    %1343 = vmatpush2.msra.mxu0 0.0
    %1344 = vmatprep.subr.mxu0 0.0
    %1345 = vmatpush2.msra.mxu0 0.0
    %1346 = vmatprep.subr.mxu0 0.0
    %1347 = vmatpush2.msra.mxu0 0.0
    %1348 = vmatprep.subr.mxu0 0.0
    %1349 = vmatpush2.msra.mxu0 0.0
    %1350 = vmatprep.subr.mxu0 0.0
    %1351 = vmatpush2.msra.mxu0 0.0
    %1352 = vmatprep.subr.mxu0 0.0
    %1353 = vmatpush2.msra.mxu0 0.0
    %1354 = vmatprep.mubr.f32.mxu0 0.0
    %1355 = vmatmul.mubr.f32.gmra.mxu0 %v1285
    %v1356 = vpop.f32.mrf.mxu0
    %v1357 = vadd.f32 0.0, %v1356
    %v1358 = vpop.f32.mrf.mxu0
    %1359 = vmatprep.mubr.f32.mxu0 0.0
    %1360 = vmatmul.mubr.f32.gmra.mxu0 %v1288
    %v1361 = vpop.f32.mrf.mxu0
    %v1362 = vadd.f32 0.0, %v1361
    %v1363 = vpop.f32.mrf.mxu0
    %1364 = vdwg.mxu0
    %1365 = vst.msk [vmem:[#allocation5] sm:$0xff] %vm25, %v1357
    %1366 = vst.msk [vmem:[#allocation5 + $0x8] sm:$0xff] %vm25, %v1362
    // Predicated region
    $region10: #{tpu_custom_call.1} parent=1 // pred_check
      _
    $region11: #{tpu_custom_call.1} parent=1 // pred_check_branch
      %1368 = sbr.rel (0) target = $region13
    $region12: #{tpu_custom_call.1} parent=1 // pred_region
      %s1370 = ssub.s32 256, 256
      %1371 = vsyncadd [#allocation4], %s1370
      %s1372 = sshll.u32 [#allocation5], 4
      %s1373 = int_to_ptr.vmem [resolvable:$true] %s1372
      %1378 = dma.vmem_to_hbm [thread:$0]  %s1373, 256, %s1, [#allocation4], 128, 128, 8
    $region13: #{tpu_custom_call.1} parent=1 // pred_fallthru
      _
    // Predicated region
    $region14: #{tpu_custom_call.1} parent=1 // pred_check
      _
    $region15: #{tpu_custom_call.1} parent=1 // pred_check_branch
      %1380 = sbr.rel (0) target = $region17
    $region16: #{tpu_custom_call.1} parent=1 // pred_region
      %1381 = dma.done [#allocation4], 256
    $region17: #{tpu_custom_call.1} parent=1 // pred_fallthru
      _
    %1382 = vsyncpa [#allocation3], 1
    %1383 = vsyncpa [#allocation4], 1

</llo_original>
